<compile_context>
chip_gen: v7x
topology: tpu7x:2x2x1
jax: 0.10.0
libtpu: 0.0.40
codegen_flags: <defaults>
</compile_context>

<pallas_src>
import jax
import jax.numpy as jnp
from jax.experimental import pallas as pl
from jax.experimental.pallas import tpu as pltpu

EPS = 1e-5          # nn.BatchNorm2d default eps
NEG_SLOPE = 0.2     # nn.LeakyReLU(0.2)
KSZ = 4             # all convs are 4x4
NZ_PAD = 128        # lane-dense padded width of the final output


# --------------------------- fused Pallas kernel -----------------------------

def _encoder_kernel(p1_ref, w1_ref, w2_ref, bn_ref, w3_ref, out_ref):
    B = out_ref.shape[0]
    C1 = w1_ref.shape[1]                 # ndf
    C2 = w2_ref.shape[1]                 # 2*ndf
    KK = KSZ * KSZ                       # 16
    Q = p1_ref.shape[0] // KK            # H2*W2*B, rows ordered (i, j, b)
    M2 = Q // B                          # H2*W2

    # ---- layer 1: one MXU matmul producing, per (ki,kj) row block, the
    # layer-1 activation that feeds that tap of the layer-2 conv  + LeakyReLU.
    # Zero patch rows (layer-2 halo) stay exactly zero through dot+leaky.
    y1 = jnp.dot(p1_ref[...], w1_ref[...], preferred_element_type=jnp.float32)
    y1 = jnp.where(y1 >= 0.0, y1, NEG_SLOPE * y1)            # [KK*Q, C1]

    # ---- register-level im2col for the pyramid conv: lane-dense [Q, KK*C1] --
    p2 = jnp.concatenate([y1[k * Q:(k + 1) * Q, :] for k in range(KK)], axis=1)

    # ---- layer 2: ONE MXU matmul over the whole batch -----------------------
    y2 = jnp.dot(p2, w2_ref[...], preferred_element_type=jnp.float32)  # [Q, C2]

    # ---- BatchNorm2d (training-mode stats over N,H,W = all Q rows) ----------
    # Two-pass variance (sum((x-mean)^2)/N) to avoid E[x^2]-mean^2 cancellation.
    inv_n = 1.0 / Q
    mean = jnp.sum(y2, axis=0, keepdims=True) * inv_n
    d = y2 - mean
    var = jnp.sum(d * d, axis=0, keepdims=True) * inv_n
    scale = bn_ref[0:1, :] * jax.lax.rsqrt(var + EPS)          # gamma folded in
    yn = d * scale + bn_ref[1:2, :]                            # + beta
    yn = jnp.where(yn >= 0.0, yn, NEG_SLOPE * yn)              # LeakyReLU(0.2)

    # ---- layer 3: final 4x4 valid conv.  Rows of yn are ordered (s, b), so
    # the [B, M2*C2] patch rows are a pure lane concatenation (in registers).
    p3 = jnp.concatenate([yn[s * B:(s + 1) * B, :] for s in range(M2)], axis=1)
    out_ref[...] = jnp.dot(p3, w3_ref[...],
                           preferred_element_type=jnp.float32)  # [B, 128]


# ------------------------------ JAX wrapper ----------------------------------

def _layer1_patch_groups(x, H1, W1, H2, W2):
    """x [B,C,16,16] -> [(K*K)*(H2*W2*B), C*K*K] layer-1 input patches.

    Row block kk = ki*K + kj holds, with rows ordered ((i*W2+j), b), the layer-1
    input patch whose layer-1 output feeds kernel tap (ki,kj) of layer-2 output
    position (i,j); out-of-range taps (layer-2 zero padding) are zero rows.
    Patch columns are (c_in, ai, aj) to match Conv2d weight flattening.
    Built with static strided slices only (no gathers)."""
    B, C, _, _ = x.shape
    CK = C * KSZ * KSZ
    xp = jnp.pad(x, ((0, 0), (0, 0), (1, 1), (1, 1)))
    taps = []
    for ai in range(KSZ):
        for aj in range(KSZ):
            taps.append(xp[:, :, ai:ai + 2 * H1:2, aj:aj + 2 * W1:2])  # [B,C,H1,W1]
    pat = jnp.stack(taps, axis=-1)                       # [B, C, H1, W1, K*K]
    pat = pat.transpose(0, 2, 3, 1, 4).reshape(B, H1, W1, CK)   # cols (c,ai,aj)
    patp = jnp.pad(pat, ((0, 0), (1, 1), (1, 1), (0, 0)))       # layer-2 halo -> 0
    groups = []
    for ki in range(KSZ):
        for kj in range(KSZ):
            # layer-1 output pos (2i+ki-1, 2j+kj-1)  ->  padded index ki+2i, kj+2j
            sel = patp[:, ki:ki + 2 * H2:2, kj:kj + 2 * W2:2, :]   # [B,H2,W2,CK]
            groups.append(sel.transpose(1, 2, 0, 3).reshape(H2 * W2 * B, CK))
    return jnp.concatenate(groups, axis=0)


def init_params(key, input_nc, ndf, nz):
    """Encoder params for isize=16, n_extra_layers=0 (DCGAN-style init)."""
    k1, k2, k3, k4, k5 = jax.random.split(key, 5)
    cndf = ndf * 2
    return {
        "w1": 0.02 * jax.random.normal(k1, (ndf, input_nc, 4, 4), jnp.float32),
        "w2": 0.02 * jax.random.normal(k2, (cndf, ndf, 4, 4), jnp.float32),
        "gamma": 1.0 + 0.02 * jax.random.normal(k3, (cndf,), jnp.float32),
        "beta": 0.02 * jax.random.normal(k4, (cndf,), jnp.float32),
        "w3": 0.02 * jax.random.normal(k5, (nz, cndf, 4, 4), jnp.float32),
    }


@jax.jit
def encoder_forward(params, x):
    """Encoder.forward for isize=16, n_extra_layers=0: returns [B, nz, 1, 1]."""
    B = x.shape[0]
    ndf = params["w1"].shape[0]
    cndf = params["w2"].shape[0]
    nz = params["w3"].shape[0]
    isize = x.shape[2]
    H1 = W1 = (isize + 2 - KSZ) // 2 + 1          # 8
    H2 = W2 = (H1 + 2 - KSZ) // 2 + 1             # 4

    p1all = _layer1_patch_groups(x, H1, W1, H2, W2)        # [16*H2*W2*B, C*16]

    # weight / BN-parameter packing (pure reshapes/transposes, once per call)
    w1m = params["w1"].reshape(ndf, -1).T                          # (c,ai,aj) x ndf
    w2m = params["w2"].transpose(0, 2, 3, 1).reshape(cndf, -1).T   # (ki,kj,c) x cndf
    bn2 = jnp.stack([params["gamma"], params["beta"]], axis=0)     # [2, cndf]
    w3m = params["w3"].transpose(0, 2, 3, 1).reshape(nz, -1).T     # (i,j,c)  x nz
    w3p = jnp.zeros((w3m.shape[0], NZ_PAD), jnp.float32).at[:, :nz].set(w3m)

    out = pl.pallas_call(
        _encoder_kernel,
        out_shape=jax.ShapeDtypeStruct((B, NZ_PAD), jnp.float32),
        in_specs=[pl.BlockSpec(memory_space=pltpu.MemorySpace.VMEM)] * 5,
        out_specs=pl.BlockSpec(memory_space=pltpu.MemorySpace.VMEM),
    )(p1all, w1m, w2m, bn2, w3p)

    return out[:, :nz].reshape(B, nz, 1, 1)


# ------------------------------ reference ------------------------------------

def _encoder_ref(params, x):
    dn = ("NCHW", "OIHW", "NCHW")
    hi = jax.lax.Precision.HIGHEST
    y = jax.lax.conv_general_dilated(x, params["w1"], (2, 2), ((1, 1), (1, 1)),
                                     dimension_numbers=dn, precision=hi)
    y = jnp.where(y >= 0, y, NEG_SLOPE * y)
    y = jax.lax.conv_general_dilated(y, params["w2"], (2, 2), ((1, 1), (1, 1)),
                                     dimension_numbers=dn, precision=hi)
    mean = jnp.mean(y, axis=(0, 2, 3), keepdims=True)
    var = jnp.var(y, axis=(0, 2, 3), keepdims=True)
    y = (y - mean) * jax.lax.rsqrt(var + EPS)
    y = y * params["gamma"][None, :, None, None] + params["beta"][None, :, None, None]
    y = jnp.where(y >= 0, y, NEG_SLOPE * y)
    y = jax.lax.conv_general_dilated(y, params["w3"], (1, 1), ((0, 0), (0, 0)),
                                     dimension_numbers=dn, precision=hi)
    return y


if __name__ == "__main__":
    # Encoder(isize=16, nz=8, input_nc=3, ndf=8, ngpu=1, n_extra_layers=0)
    B, C, ISIZE, NDF, NZ = 2, 3, 16, 8, 8
    key = jax.random.PRNGKey(0)
    kx, kp = jax.random.split(key)
    x = jax.random.normal(kx, (B, C, ISIZE, ISIZE), jnp.float32)
    params = init_params(kp, C, NDF, NZ)

    out = encoder_forward(params, x)
    jax.block_until_ready(out)
    assert out.shape == (B, NZ, 1, 1)

    ref = _encoder_ref(params, x)
    err = float(jnp.max(jnp.abs(out - ref)))
    # 2e-3 bounds worst-case MXU operand rounding of the in-kernel f32 dots
    # (if the backend lowers them at default/bf16-operand precision) while any
    # packing/ordering bug would show up at O(1e-1); with full-precision f32
    # matmuls the observed error is ~1e-6.
    assert err < 2e-3, f"max abs diff vs reference: {err}"
    print("KERNEL_OK")
</pallas_src>

<mosaic_0001>
module attributes {stable_mosaic.version = 11 : i64} {
  func.func @_encoder_kernel(%arg0: memref<512x48xf32, #tpu.memory_space<vmem>>, %arg1: memref<48x8xf32, #tpu.memory_space<vmem>>, %arg2: memref<128x16xf32, #tpu.memory_space<vmem>>, %arg3: memref<2x16xf32, #tpu.memory_space<vmem>>, %arg4: memref<256x128xf32, #tpu.memory_space<vmem>>, %arg5: memref<2x128xf32, #tpu.memory_space<vmem>>) attributes {dimension_semantics = [], scalar_prefetch = 0 : i64, scratch_operands = 0 : i64, tpu.core_type = #tpu.core_type<tc>} {
    %c0 = arith.constant 0 : index
    %c0_0 = arith.constant 0 : index
    %0 = vector.load %arg0[%c0, %c0_0] : memref<512x48xf32, #tpu.memory_space<vmem>>, vector<512x48xf32>
    %c0_1 = arith.constant 0 : index
    %c0_2 = arith.constant 0 : index
    %1 = vector.load %arg1[%c0_1, %c0_2] : memref<48x8xf32, #tpu.memory_space<vmem>>, vector<48x8xf32>
    %cst = arith.constant dense<0.000000e+00> : vector<512x8xf32>
    %2 = tpu.matmul %0, %1, %cst {dimension_numbers = #tpu.dot_dimension_numbers<[1], [0], [0], [1], [0, 0, 1, 1], [], []>} : vector<512x48xf32>, vector<48x8xf32>, vector<512x8xf32> -> vector<512x8xf32>
    %cst_3 = arith.constant 0.000000e+00 : f32
    %3 = vector.broadcast %cst_3 : f32 to vector<512x8xf32>
    %4 = arith.cmpf oge, %2, %3 : vector<512x8xf32>
    %cst_4 = arith.constant 2.000000e-01 : f32
    %5 = vector.broadcast %cst_4 : f32 to vector<512x8xf32>
    %6 = arith.mulf %5, %2 : vector<512x8xf32>
    %7 = arith.select %4, %2, %6 : vector<512x8xi1>, vector<512x8xf32>
    %8 = vector.extract_strided_slice %7 {offsets = [0, 0], sizes = [32, 8], strides = [1, 1]} : vector<512x8xf32> to vector<32x8xf32>
    %9 = vector.extract_strided_slice %7 {offsets = [32, 0], sizes = [32, 8], strides = [1, 1]} : vector<512x8xf32> to vector<32x8xf32>
    %10 = vector.extract_strided_slice %7 {offsets = [64, 0], sizes = [32, 8], strides = [1, 1]} : vector<512x8xf32> to vector<32x8xf32>
    %11 = vector.extract_strided_slice %7 {offsets = [96, 0], sizes = [32, 8], strides = [1, 1]} : vector<512x8xf32> to vector<32x8xf32>
    %12 = vector.extract_strided_slice %7 {offsets = [128, 0], sizes = [32, 8], strides = [1, 1]} : vector<512x8xf32> to vector<32x8xf32>
    %13 = vector.extract_strided_slice %7 {offsets = [160, 0], sizes = [32, 8], strides = [1, 1]} : vector<512x8xf32> to vector<32x8xf32>
    %14 = vector.extract_strided_slice %7 {offsets = [192, 0], sizes = [32, 8], strides = [1, 1]} : vector<512x8xf32> to vector<32x8xf32>
    %15 = vector.extract_strided_slice %7 {offsets = [224, 0], sizes = [32, 8], strides = [1, 1]} : vector<512x8xf32> to vector<32x8xf32>
    %16 = vector.extract_strided_slice %7 {offsets = [256, 0], sizes = [32, 8], strides = [1, 1]} : vector<512x8xf32> to vector<32x8xf32>
    %17 = vector.extract_strided_slice %7 {offsets = [288, 0], sizes = [32, 8], strides = [1, 1]} : vector<512x8xf32> to vector<32x8xf32>
    %18 = vector.extract_strided_slice %7 {offsets = [320, 0], sizes = [32, 8], strides = [1, 1]} : vector<512x8xf32> to vector<32x8xf32>
    %19 = vector.extract_strided_slice %7 {offsets = [352, 0], sizes = [32, 8], strides = [1, 1]} : vector<512x8xf32> to vector<32x8xf32>
    %20 = vector.extract_strided_slice %7 {offsets = [384, 0], sizes = [32, 8], strides = [1, 1]} : vector<512x8xf32> to vector<32x8xf32>
    %21 = vector.extract_strided_slice %7 {offsets = [416, 0], sizes = [32, 8], strides = [1, 1]} : vector<512x8xf32> to vector<32x8xf32>
    %22 = vector.extract_strided_slice %7 {offsets = [448, 0], sizes = [32, 8], strides = [1, 1]} : vector<512x8xf32> to vector<32x8xf32>
    %23 = vector.extract_strided_slice %7 {offsets = [480, 0], sizes = [32, 8], strides = [1, 1]} : vector<512x8xf32> to vector<32x8xf32>
    %24 = tpu.concatenate %8, %9, %10, %11, %12, %13, %14, %15, %16, %17, %18, %19, %20, %21, %22, %23 in 1 : vector<32x8xf32>, vector<32x8xf32>, vector<32x8xf32>, vector<32x8xf32>, vector<32x8xf32>, vector<32x8xf32>, vector<32x8xf32>, vector<32x8xf32>, vector<32x8xf32>, vector<32x8xf32>, vector<32x8xf32>, vector<32x8xf32>, vector<32x8xf32>, vector<32x8xf32>, vector<32x8xf32>, vector<32x8xf32> -> vector<32x128xf32>
    %c0_5 = arith.constant 0 : index
    %c0_6 = arith.constant 0 : index
    %25 = vector.load %arg2[%c0_5, %c0_6] : memref<128x16xf32, #tpu.memory_space<vmem>>, vector<128x16xf32>
    %cst_7 = arith.constant dense<0.000000e+00> : vector<32x16xf32>
    %26 = tpu.matmul %24, %25, %cst_7 {dimension_numbers = #tpu.dot_dimension_numbers<[1], [0], [0], [1], [0, 0, 1, 1], [], []>} : vector<32x128xf32>, vector<128x16xf32>, vector<32x16xf32> -> vector<32x16xf32>
    %cst_8 = arith.constant dense<0.000000e+00> : vector<16xf32>
    %27 = vector.multi_reduction <add>, %26, %cst_8 [0] : vector<32x16xf32> to vector<16xf32>
    %28 = vector.shape_cast %27 : vector<16xf32> to vector<1x16xf32>
    %cst_9 = arith.constant 3.125000e-02 : f32
    %29 = vector.broadcast %cst_9 : f32 to vector<1x16xf32>
    %30 = arith.mulf %28, %29 : vector<1x16xf32>
    %31 = vector.broadcast %30 : vector<1x16xf32> to vector<32x16xf32>
    %32 = arith.subf %26, %31 : vector<32x16xf32>
    %33 = arith.mulf %32, %32 : vector<32x16xf32>
    %cst_10 = arith.constant dense<0.000000e+00> : vector<16xf32>
    %34 = vector.multi_reduction <add>, %33, %cst_10 [0] : vector<32x16xf32> to vector<16xf32>
    %35 = vector.shape_cast %34 : vector<16xf32> to vector<1x16xf32>
    %cst_11 = arith.constant 3.125000e-02 : f32
    %36 = vector.broadcast %cst_11 : f32 to vector<1x16xf32>
    %37 = arith.mulf %35, %36 : vector<1x16xf32>
    %c0_12 = arith.constant 0 : index
    %c0_13 = arith.constant 0 : index
    %38 = vector.load %arg3[%c0_12, %c0_13] : memref<2x16xf32, #tpu.memory_space<vmem>>, vector<1x16xf32>
    %cst_14 = arith.constant 9.99999974E-6 : f32
    %39 = vector.broadcast %cst_14 : f32 to vector<1x16xf32>
    %40 = arith.addf %37, %39 : vector<1x16xf32>
    %41 = math.rsqrt %40 : vector<1x16xf32>
    %42 = arith.mulf %38, %41 : vector<1x16xf32>
    %43 = vector.broadcast %42 : vector<1x16xf32> to vector<32x16xf32>
    %44 = arith.mulf %32, %43 : vector<32x16xf32>
    %c1 = arith.constant 1 : index
    %c0_15 = arith.constant 0 : index
    %45 = vector.load %arg3[%c1, %c0_15] : memref<2x16xf32, #tpu.memory_space<vmem>>, vector<1x16xf32>
    %46 = vector.broadcast %45 : vector<1x16xf32> to vector<32x16xf32>
    %47 = arith.addf %44, %46 : vector<32x16xf32>
    %cst_16 = arith.constant 0.000000e+00 : f32
    %48 = vector.broadcast %cst_16 : f32 to vector<32x16xf32>
    %49 = arith.cmpf oge, %47, %48 : vector<32x16xf32>
    %cst_17 = arith.constant 2.000000e-01 : f32
    %50 = vector.broadcast %cst_17 : f32 to vector<32x16xf32>
    %51 = arith.mulf %50, %47 : vector<32x16xf32>
    %52 = arith.select %49, %47, %51 : vector<32x16xi1>, vector<32x16xf32>
    %53 = vector.extract_strided_slice %52 {offsets = [0, 0], sizes = [2, 16], strides = [1, 1]} : vector<32x16xf32> to vector<2x16xf32>
    %54 = vector.extract_strided_slice %52 {offsets = [2, 0], sizes = [2, 16], strides = [1, 1]} : vector<32x16xf32> to vector<2x16xf32>
    %55 = vector.extract_strided_slice %52 {offsets = [4, 0], sizes = [2, 16], strides = [1, 1]} : vector<32x16xf32> to vector<2x16xf32>
    %56 = vector.extract_strided_slice %52 {offsets = [6, 0], sizes = [2, 16], strides = [1, 1]} : vector<32x16xf32> to vector<2x16xf32>
    %57 = vector.extract_strided_slice %52 {offsets = [8, 0], sizes = [2, 16], strides = [1, 1]} : vector<32x16xf32> to vector<2x16xf32>
    %58 = vector.extract_strided_slice %52 {offsets = [10, 0], sizes = [2, 16], strides = [1, 1]} : vector<32x16xf32> to vector<2x16xf32>
    %59 = vector.extract_strided_slice %52 {offsets = [12, 0], sizes = [2, 16], strides = [1, 1]} : vector<32x16xf32> to vector<2x16xf32>
    %60 = vector.extract_strided_slice %52 {offsets = [14, 0], sizes = [2, 16], strides = [1, 1]} : vector<32x16xf32> to vector<2x16xf32>
    %61 = vector.extract_strided_slice %52 {offsets = [16, 0], sizes = [2, 16], strides = [1, 1]} : vector<32x16xf32> to vector<2x16xf32>
    %62 = vector.extract_strided_slice %52 {offsets = [18, 0], sizes = [2, 16], strides = [1, 1]} : vector<32x16xf32> to vector<2x16xf32>
    %63 = vector.extract_strided_slice %52 {offsets = [20, 0], sizes = [2, 16], strides = [1, 1]} : vector<32x16xf32> to vector<2x16xf32>
    %64 = vector.extract_strided_slice %52 {offsets = [22, 0], sizes = [2, 16], strides = [1, 1]} : vector<32x16xf32> to vector<2x16xf32>
    %65 = vector.extract_strided_slice %52 {offsets = [24, 0], sizes = [2, 16], strides = [1, 1]} : vector<32x16xf32> to vector<2x16xf32>
    %66 = vector.extract_strided_slice %52 {offsets = [26, 0], sizes = [2, 16], strides = [1, 1]} : vector<32x16xf32> to vector<2x16xf32>
    %67 = vector.extract_strided_slice %52 {offsets = [28, 0], sizes = [2, 16], strides = [1, 1]} : vector<32x16xf32> to vector<2x16xf32>
    %68 = vector.extract_strided_slice %52 {offsets = [30, 0], sizes = [2, 16], strides = [1, 1]} : vector<32x16xf32> to vector<2x16xf32>
    %69 = tpu.concatenate %53, %54, %55, %56, %57, %58, %59, %60, %61, %62, %63, %64, %65, %66, %67, %68 in 1 : vector<2x16xf32>, vector<2x16xf32>, vector<2x16xf32>, vector<2x16xf32>, vector<2x16xf32>, vector<2x16xf32>, vector<2x16xf32>, vector<2x16xf32>, vector<2x16xf32>, vector<2x16xf32>, vector<2x16xf32>, vector<2x16xf32>, vector<2x16xf32>, vector<2x16xf32>, vector<2x16xf32>, vector<2x16xf32> -> vector<2x256xf32>
    %c0_18 = arith.constant 0 : index
    %c0_19 = arith.constant 0 : index
    %70 = vector.load %arg4[%c0_18, %c0_19] : memref<256x128xf32, #tpu.memory_space<vmem>>, vector<256x128xf32>
    %cst_20 = arith.constant dense<0.000000e+00> : vector<2x128xf32>
    %71 = tpu.matmul %69, %70, %cst_20 {dimension_numbers = #tpu.dot_dimension_numbers<[1], [0], [0], [1], [0, 0, 1, 1], [], []>} : vector<2x256xf32>, vector<256x128xf32>, vector<2x128xf32> -> vector<2x128xf32>
    %c0_21 = arith.constant 0 : index
    %c0_22 = arith.constant 0 : index
    %72 = vector.load %arg5[%c0_21, %c0_22] : memref<2x128xf32, #tpu.memory_space<vmem>>, vector<2x128xf32>
    tpu.vector_store %arg5[%c0_21, %c0_22], %71 {strides = array<i32>} : memref<2x128xf32, #tpu.memory_space<vmem>>, vector<2x128xf32>,
    return
  }
}

</mosaic_0001>

<llo_original>
// kernel: encoder_forward.1
$region0: #{encoder_forward.1}
  #allocation0 [shape = 'u32[]', space=smem, size = 0x4, offset = 0x4, fixed_abs, tag = 'smem constant byte address 0x4 - core index']
  #allocation1 [shape = 'u32[144,128]{1,0:T(1,128)}', space=vmem, size = 0x12000, scoped, tag = 'internal scratch']
  %s0 = inlined_call_operand.vmem [shape: f32[512,48], index: 0, kind: input, shape index: {}]
  %s1 = inlined_call_operand.vmem [shape: f32[48,8], index: 1, kind: input, shape index: {}]
  %s2 = inlined_call_operand.vmem [shape: f32[128,16], index: 2, kind: input, shape index: {}]
  %s3 = inlined_call_operand.vmem [shape: f32[2,16], index: 3, kind: input, shape index: {}]
  %s4 = inlined_call_operand.vmem [shape: f32[256,128], index: 4, kind: input, shape index: {}]
  %s5 = inlined_call_operand.hbm [shape: f32[2,128], index: 5, kind: output, shape index: {}]
  %s6 = sld [smem:[#allocation0]]
  $region30: #{encoder_forward.1} parent=0
    _
  %s8 = ssub.s32 1, %s6
  %s9 = scalar_select 0, %s8, %s6
  $region1: #{encoder_forward.1} parent=0
    #allocation2 [shape = 'u8[1024]{0}', space=vmem, size = 0x400, scoped, tag = 'output window, operand 0, single buffered']
    #allocation3 [shape = 's32[1]{0}', space=sflag, size = 0x4, scoped, tag = 'scoped memory for encoder_forward.1']
    %10 = vsyncpa [#allocation3], 0
    // Predicated region
    $region2: #{encoder_forward.1} parent=1 // pred_check
      _
    $region3: #{encoder_forward.1} parent=1 // pred_check_branch
      %12 = sbr.rel (0) target = $region5
    $region4: #{encoder_forward.1} parent=1 // pred_region
      _
    $region5: #{encoder_forward.1} parent=1 // pred_fallthru
      _
    // Predicated region
    $region6: #{encoder_forward.1} parent=1 // pred_check
      _
    $region7: #{encoder_forward.1} parent=1 // pred_check_branch
      %14 = sbr.rel (0) target = $region9
    $region8: #{encoder_forward.1} parent=1 // pred_region
      _
    $region9: #{encoder_forward.1} parent=1 // pred_fallthru
      _
    // Predicated region
    $region10: #{encoder_forward.1} parent=1 // pred_check
      _
    $region11: #{encoder_forward.1} parent=1 // pred_check_branch
      %16 = sbr.rel (0) target = $region13
    $region12: #{encoder_forward.1} parent=1 // pred_region
      _
    $region13: #{encoder_forward.1} parent=1 // pred_fallthru
      _
    // Predicated region
    $region14: #{encoder_forward.1} parent=1 // pred_check
      _
    $region15: #{encoder_forward.1} parent=1 // pred_check_branch
      %18 = sbr.rel (0) target = $region17
    $region16: #{encoder_forward.1} parent=1 // pred_region
      _
    $region17: #{encoder_forward.1} parent=1 // pred_fallthru
      _
    // Predicated region
    $region18: #{encoder_forward.1} parent=1 // pred_check
      _
    $region19: #{encoder_forward.1} parent=1 // pred_check_branch
      %20 = sbr.rel (0) target = $region21
    $region20: #{encoder_forward.1} parent=1 // pred_region
      _
    $region21: #{encoder_forward.1} parent=1 // pred_fallthru
      _
    %v21 = vld [vmem:[%s0] sm:$0xff]
    %v22 = vld [vmem:[%s0 + $0x8] sm:$0xff]
    %v23 = vld [vmem:[%s0 + $0x10] sm:$0xff]
    %v24 = vld [vmem:[%s0 + $0x18] sm:$0xff]
    %v25 = vld [vmem:[%s0 + $0x20] sm:$0xff]
    %v26 = vld [vmem:[%s0 + $0x28] sm:$0xff]
    %v27 = vld [vmem:[%s0 + $0x30] sm:$0xff]
    %v28 = vld [vmem:[%s0 + $0x38] sm:$0xff]
    %v29 = vld [vmem:[%s0 + $0x40] sm:$0xff]
    %v30 = vld [vmem:[%s0 + $0x48] sm:$0xff]
    %v31 = vld [vmem:[%s0 + $0x50] sm:$0xff]
    %v32 = vld [vmem:[%s0 + $0x58] sm:$0xff]
    %v33 = vld [vmem:[%s0 + $0x60] sm:$0xff]
    %v34 = vld [vmem:[%s0 + $0x68] sm:$0xff]
    %v35 = vld [vmem:[%s0 + $0x70] sm:$0xff]
    %v36 = vld [vmem:[%s0 + $0x78] sm:$0xff]
    %v37 = vld [vmem:[%s0 + $0x80] sm:$0xff]
    %v38 = vld [vmem:[%s0 + $0x88] sm:$0xff]
    %v39 = vld [vmem:[%s0 + $0x90] sm:$0xff]
    %v40 = vld [vmem:[%s0 + $0x98] sm:$0xff]
    %v41 = vld [vmem:[%s0 + $0xa0] sm:$0xff]
    %v42 = vld [vmem:[%s0 + $0xa8] sm:$0xff]
    %v43 = vld [vmem:[%s0 + $0xb0] sm:$0xff]
    %v44 = vld [vmem:[%s0 + $0xb8] sm:$0xff]
    %v45 = vld [vmem:[%s0 + $0xc0] sm:$0xff]
    %v46 = vld [vmem:[%s0 + $0xc8] sm:$0xff]
    %v47 = vld [vmem:[%s0 + $0xd0] sm:$0xff]
    %v48 = vld [vmem:[%s0 + $0xd8] sm:$0xff]
    %v49 = vld [vmem:[%s0 + $0xe0] sm:$0xff]
    %v50 = vld [vmem:[%s0 + $0xe8] sm:$0xff]
    %v51 = vld [vmem:[%s0 + $0xf0] sm:$0xff]
    %v52 = vld [vmem:[%s0 + $0xf8] sm:$0xff]
    %v53 = vld [vmem:[%s0 + $0x100] sm:$0xff]
    %v54 = vld [vmem:[%s0 + $0x108] sm:$0xff]
    %v55 = vld [vmem:[%s0 + $0x110] sm:$0xff]
    %v56 = vld [vmem:[%s0 + $0x118] sm:$0xff]
    %v57 = vld [vmem:[%s0 + $0x120] sm:$0xff]
    %v58 = vld [vmem:[%s0 + $0x128] sm:$0xff]
    %v59 = vld [vmem:[%s0 + $0x130] sm:$0xff]
    %v60 = vld [vmem:[%s0 + $0x138] sm:$0xff]
    %v61 = vld [vmem:[%s0 + $0x140] sm:$0xff]
    %v62 = vld [vmem:[%s0 + $0x148] sm:$0xff]
    %v63 = vld [vmem:[%s0 + $0x150] sm:$0xff]
    %v64 = vld [vmem:[%s0 + $0x158] sm:$0xff]
    %v65 = vld [vmem:[%s0 + $0x160] sm:$0xff]
    %v66 = vld [vmem:[%s0 + $0x168] sm:$0xff]
    %v67 = vld [vmem:[%s0 + $0x170] sm:$0xff]
    %v68 = vld [vmem:[%s0 + $0x178] sm:$0xff]
    %v69 = vld [vmem:[%s0 + $0x180] sm:$0xff]
    %v70 = vld [vmem:[%s0 + $0x188] sm:$0xff]
    %v71 = vld [vmem:[%s0 + $0x190] sm:$0xff]
    %v72 = vld [vmem:[%s0 + $0x198] sm:$0xff]
    %v73 = vld [vmem:[%s0 + $0x1a0] sm:$0xff]
    %v74 = vld [vmem:[%s0 + $0x1a8] sm:$0xff]
    %v75 = vld [vmem:[%s0 + $0x1b0] sm:$0xff]
    %v76 = vld [vmem:[%s0 + $0x1b8] sm:$0xff]
    %v77 = vld [vmem:[%s0 + $0x1c0] sm:$0xff]
    %v78 = vld [vmem:[%s0 + $0x1c8] sm:$0xff]
    %v79 = vld [vmem:[%s0 + $0x1d0] sm:$0xff]
    %v80 = vld [vmem:[%s0 + $0x1d8] sm:$0xff]
    %v81 = vld [vmem:[%s0 + $0x1e0] sm:$0xff]
    %v82 = vld [vmem:[%s0 + $0x1e8] sm:$0xff]
    %v83 = vld [vmem:[%s0 + $0x1f0] sm:$0xff]
    %v84 = vld [vmem:[%s0 + $0x1f8] sm:$0xff]
    %v85 = vld [vmem:[%s1] sm:$0xff]
    %v86 = vld [vmem:[%s1 + $0x8] sm:$0xff]
    %v87 = vld [vmem:[%s1 + $0x10] sm:$0xff]
    %v88 = vld [vmem:[%s1 + $0x18] sm:$0xff]
    %v89 = vld [vmem:[%s1 + $0x20] sm:$0xff]
    %v90 = vld [vmem:[%s1 + $0x28] sm:$0xff]
    %vm91 = vcmask 392192
    %v93 = vsel %vm91, %v21, 0
    %v96 = vsel %vm91, %v22, 0
    %v99 = vsel %vm91, %v23, 0
    %v102 = vsel %vm91, %v24, 0
    %v105 = vsel %vm91, %v25, 0
    %v108 = vsel %vm91, %v26, 0
    %v111 = vsel %vm91, %v27, 0
    %v114 = vsel %vm91, %v28, 0
    %v117 = vsel %vm91, %v29, 0
    %v120 = vsel %vm91, %v30, 0
    %v123 = vsel %vm91, %v31, 0
    %v126 = vsel %vm91, %v32, 0
    %v129 = vsel %vm91, %v33, 0
    %v132 = vsel %vm91, %v34, 0
    %v135 = vsel %vm91, %v35, 0
    %v138 = vsel %vm91, %v36, 0
    %v141 = vsel %vm91, %v37, 0
    %v144 = vsel %vm91, %v38, 0
    %v147 = vsel %vm91, %v39, 0
    %v150 = vsel %vm91, %v40, 0
    %v153 = vsel %vm91, %v41, 0
    %v156 = vsel %vm91, %v42, 0
    %v159 = vsel %vm91, %v43, 0
    %v162 = vsel %vm91, %v44, 0
    %v165 = vsel %vm91, %v45, 0
    %v168 = vsel %vm91, %v46, 0
    %v171 = vsel %vm91, %v47, 0
    %v174 = vsel %vm91, %v48, 0
    %v177 = vsel %vm91, %v49, 0
    %v180 = vsel %vm91, %v50, 0
    %v183 = vsel %vm91, %v51, 0
    %v186 = vsel %vm91, %v52, 0
    %v189 = vsel %vm91, %v53, 0
    %v192 = vsel %vm91, %v54, 0
    %v195 = vsel %vm91, %v55, 0
    %v198 = vsel %vm91, %v56, 0
    %v201 = vsel %vm91, %v57, 0
    %v204 = vsel %vm91, %v58, 0
    %v207 = vsel %vm91, %v59, 0
    %v210 = vsel %vm91, %v60, 0
    %v213 = vsel %vm91, %v61, 0
    %v216 = vsel %vm91, %v62, 0
    %v219 = vsel %vm91, %v63, 0
    %v222 = vsel %vm91, %v64, 0
    %v225 = vsel %vm91, %v65, 0
    %v228 = vsel %vm91, %v66, 0
    %v231 = vsel %vm91, %v67, 0
    %v234 = vsel %vm91, %v68, 0
    %v237 = vsel %vm91, %v69, 0
    %v240 = vsel %vm91, %v70, 0
    %v243 = vsel %vm91, %v71, 0
    %v246 = vsel %vm91, %v72, 0
    %v249 = vsel %vm91, %v73, 0
    %v252 = vsel %vm91, %v74, 0
    %v255 = vsel %vm91, %v75, 0
    %v258 = vsel %vm91, %v76, 0
    %v261 = vsel %vm91, %v77, 0
    %v264 = vsel %vm91, %v78, 0
    %v267 = vsel %vm91, %v79, 0
    %v270 = vsel %vm91, %v80, 0
    %v273 = vsel %vm91, %v81, 0
    %v276 = vsel %vm91, %v82, 0
    %v279 = vsel %vm91, %v83, 0
    %v282 = vsel %vm91, %v84, 0
    %284 = vmatprep.subr.mxu0 0.0
    %285 = vmatpush1.msra.mxu0 %v85
    %286 = vmatprep.subr.mxu0 0.0
    %287 = vmatpush1.msra.mxu0 %v86
    %288 = vmatprep.subr.mxu0 0.0
    %289 = vmatpush1.msra.mxu0 %v87
    %290 = vmatprep.subr.mxu0 0.0
    %291 = vmatpush1.msra.mxu0 %v88
    %292 = vmatprep.subr.mxu0 0.0
    %293 = vmatpush1.msra.mxu0 %v89
    %294 = vmatprep.subr.mxu0 0.0
    %295 = vmatpush1.msra.mxu0 %v90
    %296 = vmatprep.subr.mxu0 0.0
    %297 = vmatpush1.msra.mxu0 0.0
    %298 = vmatprep.subr.mxu0 0.0
    %299 = vmatpush1.msra.mxu0 0.0
    %300 = vmatprep.subr.mxu0 0.0
    %301 = vmatpush1.msra.mxu0 0.0
    %302 = vmatprep.subr.mxu0 0.0
    %303 = vmatpush1.msra.mxu0 0.0
    %304 = vmatprep.subr.mxu0 0.0
    %305 = vmatpush1.msra.mxu0 0.0
    %306 = vmatprep.subr.mxu0 0.0
    %307 = vmatpush1.msra.mxu0 0.0
    %308 = vmatprep.subr.mxu0 0.0
    %309 = vmatpush1.msra.mxu0 0.0
    %310 = vmatprep.subr.mxu0 0.0
    %311 = vmatpush1.msra.mxu0 0.0
    %312 = vmatprep.subr.mxu0 0.0
    %313 = vmatpush1.msra.mxu0 0.0
    %314 = vmatprep.subr.mxu0 0.0
    %315 = vmatpush1.msra.mxu0 0.0
    %316 = vmatprep.subr.mxu0 0.0
    %317 = vmatpush1.msra.mxu0 0.0
    %318 = vmatprep.subr.mxu0 0.0
    %319 = vmatpush1.msra.mxu0 0.0
    %320 = vmatprep.subr.mxu0 0.0
    %321 = vmatpush1.msra.mxu0 0.0
    %322 = vmatprep.subr.mxu0 0.0
    %323 = vmatpush1.msra.mxu0 0.0
    %324 = vmatprep.subr.mxu0 0.0
    %325 = vmatpush1.msra.mxu0 0.0
    %326 = vmatprep.subr.mxu0 0.0
    %327 = vmatpush1.msra.mxu0 0.0
    %328 = vmatprep.subr.mxu0 0.0
    %329 = vmatpush1.msra.mxu0 0.0
    %330 = vmatprep.subr.mxu0 0.0
    %331 = vmatpush1.msra.mxu0 0.0
    %332 = vmatprep.subr.mxu0 0.0
    %333 = vmatpush1.msra.mxu0 0.0
    %334 = vmatprep.subr.mxu0 0.0
    %335 = vmatpush1.msra.mxu0 0.0
    %336 = vmatprep.subr.mxu0 0.0
    %337 = vmatpush1.msra.mxu0 0.0
    %338 = vmatprep.subr.mxu0 0.0
    %339 = vmatpush1.msra.mxu0 0.0
    %340 = vmatprep.subr.mxu0 0.0
    %341 = vmatpush1.msra.mxu0 0.0
    %342 = vmatprep.subr.mxu0 0.0
    %343 = vmatpush1.msra.mxu0 0.0
    %344 = vmatprep.subr.mxu0 0.0
    %345 = vmatpush1.msra.mxu0 0.0
    %346 = vmatprep.subr.mxu0 0.0
    %347 = vmatpush1.msra.mxu0 0.0
    %348 = vmatprep.mubr.f32.mxu0 0.0
    %349 = vmatmul.mubr.f32.gmra.mrb[0].mxu0 %v93
    %v350 = vpop.f32.mrb[0].mxu0
    %v351 = vadd.f32 0.0, %v350
    %v352 = vpop.f32.mrb[0].mxu0
    %353 = vmatprep.mubr.f32.mxu0 0.0
    %354 = vmatmul.mubr.f32.gmra.mrb[0].mxu0 %v96
    %v355 = vpop.f32.mrb[0].mxu0
    %v356 = vadd.f32 0.0, %v355
    %v357 = vpop.f32.mrb[0].mxu0
    %358 = vmatprep.mubr.f32.mxu0 0.0
    %359 = vmatmul.mubr.f32.gmra.mrb[0].mxu0 %v99
    %v360 = vpop.f32.mrb[0].mxu0
    %v361 = vadd.f32 0.0, %v360
    %v362 = vpop.f32.mrb[0].mxu0
    %363 = vmatprep.mubr.f32.mxu0 0.0
    %364 = vmatmul.mubr.f32.gmra.mrb[0].mxu0 %v102
    %v365 = vpop.f32.mrb[0].mxu0
    %v366 = vadd.f32 0.0, %v365
    %v367 = vpop.f32.mrb[0].mxu0
    %368 = vmatprep.mubr.f32.mxu0 0.0
    %369 = vmatmul.mubr.f32.gmra.mrb[0].mxu0 %v105
    %v370 = vpop.f32.mrb[0].mxu0
    %v371 = vadd.f32 0.0, %v370
    %v372 = vpop.f32.mrb[0].mxu0
    %373 = vmatprep.mubr.f32.mxu0 0.0
    %374 = vmatmul.mubr.f32.gmra.mrb[0].mxu0 %v108
    %v375 = vpop.f32.mrb[0].mxu0
    %v376 = vadd.f32 0.0, %v375
    %v377 = vpop.f32.mrb[0].mxu0
    %378 = vmatprep.mubr.f32.mxu0 0.0
    %379 = vmatmul.mubr.f32.gmra.mrb[0].mxu0 %v111
    %v380 = vpop.f32.mrb[0].mxu0
    %v381 = vadd.f32 0.0, %v380
    %v382 = vpop.f32.mrb[0].mxu0
    %383 = vmatprep.mubr.f32.mxu0 0.0
    %384 = vmatmul.mubr.f32.gmra.mrb[0].mxu0 %v114
    %v385 = vpop.f32.mrb[0].mxu0
    %v386 = vadd.f32 0.0, %v385
    %v387 = vpop.f32.mrb[0].mxu0
    %388 = vmatprep.mubr.f32.mxu0 0.0
    %389 = vmatmul.mubr.f32.gmra.mrb[0].mxu0 %v117
    %v390 = vpop.f32.mrb[0].mxu0
    %v391 = vadd.f32 0.0, %v390
    %v392 = vpop.f32.mrb[0].mxu0
    %393 = vmatprep.mubr.f32.mxu0 0.0
    %394 = vmatmul.mubr.f32.gmra.mrb[0].mxu0 %v120
    %v395 = vpop.f32.mrb[0].mxu0
    %v396 = vadd.f32 0.0, %v395
    %v397 = vpop.f32.mrb[0].mxu0
    %398 = vmatprep.mubr.f32.mxu0 0.0
    %399 = vmatmul.mubr.f32.gmra.mrb[0].mxu0 %v123
    %v400 = vpop.f32.mrb[0].mxu0
    %v401 = vadd.f32 0.0, %v400
    %v402 = vpop.f32.mrb[0].mxu0
    %403 = vmatprep.mubr.f32.mxu0 0.0
    %404 = vmatmul.mubr.f32.gmra.mrb[0].mxu0 %v126
    %v405 = vpop.f32.mrb[0].mxu0
    %v406 = vadd.f32 0.0, %v405
    %v407 = vpop.f32.mrb[0].mxu0
    %408 = vmatprep.mubr.f32.mxu0 0.0
    %409 = vmatmul.mubr.f32.gmra.mrb[0].mxu0 %v129
    %v410 = vpop.f32.mrb[0].mxu0
    %v411 = vadd.f32 0.0, %v410
    %v412 = vpop.f32.mrb[0].mxu0
    %413 = vmatprep.mubr.f32.mxu0 0.0
    %414 = vmatmul.mubr.f32.gmra.mrb[0].mxu0 %v132
    %v415 = vpop.f32.mrb[0].mxu0
    %v416 = vadd.f32 0.0, %v415
    %v417 = vpop.f32.mrb[0].mxu0
    %418 = vmatprep.mubr.f32.mxu0 0.0
    %419 = vmatmul.mubr.f32.gmra.mrb[0].mxu0 %v135
    %v420 = vpop.f32.mrb[0].mxu0
    %v421 = vadd.f32 0.0, %v420
    %v422 = vpop.f32.mrb[0].mxu0
    %423 = vmatprep.mubr.f32.mxu0 0.0
    %424 = vmatmul.mubr.f32.gmra.mrb[0].mxu0 %v138
    %v425 = vpop.f32.mrb[0].mxu0
    %v426 = vadd.f32 0.0, %v425
    %v427 = vpop.f32.mrb[0].mxu0
    %428 = vmatprep.mubr.f32.mxu0 0.0
    %429 = vmatmul.mubr.f32.gmra.mrb[0].mxu0 %v141
    %v430 = vpop.f32.mrb[0].mxu0
    %v431 = vadd.f32 0.0, %v430
    %v432 = vpop.f32.mrb[0].mxu0
    %433 = vmatprep.mubr.f32.mxu0 0.0
    %434 = vmatmul.mubr.f32.gmra.mrb[0].mxu0 %v144
    %v435 = vpop.f32.mrb[0].mxu0
    %v436 = vadd.f32 0.0, %v435
    %v437 = vpop.f32.mrb[0].mxu0
    %438 = vmatprep.mubr.f32.mxu0 0.0
    %439 = vmatmul.mubr.f32.gmra.mrb[0].mxu0 %v147
    %v440 = vpop.f32.mrb[0].mxu0
    %v441 = vadd.f32 0.0, %v440
    %v442 = vpop.f32.mrb[0].mxu0
    %443 = vmatprep.mubr.f32.mxu0 0.0
    %444 = vmatmul.mubr.f32.gmra.mrb[0].mxu0 %v150
    %v445 = vpop.f32.mrb[0].mxu0
    %v446 = vadd.f32 0.0, %v445
    %v447 = vpop.f32.mrb[0].mxu0
    %448 = vmatprep.mubr.f32.mxu0 0.0
    %449 = vmatmul.mubr.f32.gmra.mrb[0].mxu0 %v153
    %v450 = vpop.f32.mrb[0].mxu0
    %v451 = vadd.f32 0.0, %v450
    %v452 = vpop.f32.mrb[0].mxu0
    %453 = vmatprep.mubr.f32.mxu0 0.0
    %454 = vmatmul.mubr.f32.gmra.mrb[0].mxu0 %v156
    %v455 = vpop.f32.mrb[0].mxu0
    %v456 = vadd.f32 0.0, %v455
    %v457 = vpop.f32.mrb[0].mxu0
    %458 = vmatprep.mubr.f32.mxu0 0.0
    %459 = vmatmul.mubr.f32.gmra.mrb[0].mxu0 %v159
    %v460 = vpop.f32.mrb[0].mxu0
    %v461 = vadd.f32 0.0, %v460
    %v462 = vpop.f32.mrb[0].mxu0
    %463 = vmatprep.mubr.f32.mxu0 0.0
    %464 = vmatmul.mubr.f32.gmra.mrb[0].mxu0 %v162
    %v465 = vpop.f32.mrb[0].mxu0
    %v466 = vadd.f32 0.0, %v465
    %v467 = vpop.f32.mrb[0].mxu0
    %468 = vmatprep.mubr.f32.mxu0 0.0
    %469 = vmatmul.mubr.f32.gmra.mrb[0].mxu0 %v165
    %v470 = vpop.f32.mrb[0].mxu0
    %v471 = vadd.f32 0.0, %v470
    %v472 = vpop.f32.mrb[0].mxu0
    %473 = vmatprep.mubr.f32.mxu0 0.0
    %474 = vmatmul.mubr.f32.gmra.mrb[0].mxu0 %v168
    %v475 = vpop.f32.mrb[0].mxu0
    %v476 = vadd.f32 0.0, %v475
    %v477 = vpop.f32.mrb[0].mxu0
    %478 = vmatprep.mubr.f32.mxu0 0.0
    %479 = vmatmul.mubr.f32.gmra.mrb[0].mxu0 %v171
    %v480 = vpop.f32.mrb[0].mxu0
    %v481 = vadd.f32 0.0, %v480
    %v482 = vpop.f32.mrb[0].mxu0
    %483 = vmatprep.mubr.f32.mxu0 0.0
    %484 = vmatmul.mubr.f32.gmra.mrb[0].mxu0 %v174
    %v485 = vpop.f32.mrb[0].mxu0
    %v486 = vadd.f32 0.0, %v485
    %v487 = vpop.f32.mrb[0].mxu0
    %488 = vmatprep.mubr.f32.mxu0 0.0
    %489 = vmatmul.mubr.f32.gmra.mrb[0].mxu0 %v177
    %v490 = vpop.f32.mrb[0].mxu0
    %v491 = vadd.f32 0.0, %v490
    %v492 = vpop.f32.mrb[0].mxu0
    %493 = vmatprep.mubr.f32.mxu0 0.0
    %494 = vmatmul.mubr.f32.gmra.mrb[0].mxu0 %v180
    %v495 = vpop.f32.mrb[0].mxu0
    %v496 = vadd.f32 0.0, %v495
    %v497 = vpop.f32.mrb[0].mxu0
    %498 = vmatprep.mubr.f32.mxu0 0.0
    %499 = vmatmul.mubr.f32.gmra.mrb[0].mxu0 %v183
    %v500 = vpop.f32.mrb[0].mxu0
    %v501 = vadd.f32 0.0, %v500
    %v502 = vpop.f32.mrb[0].mxu0
    %503 = vmatprep.mubr.f32.mxu0 0.0
    %504 = vmatmul.mubr.f32.gmra.mrb[0].mxu0 %v186
    %v505 = vpop.f32.mrb[0].mxu0
    %v506 = vadd.f32 0.0, %v505
    %v507 = vpop.f32.mrb[0].mxu0
    %508 = vmatprep.mubr.f32.mxu0 0.0
    %509 = vmatmul.mubr.f32.gmra.mrb[0].mxu0 %v189
    %v510 = vpop.f32.mrb[0].mxu0
    %v511 = vadd.f32 0.0, %v510
    %v512 = vpop.f32.mrb[0].mxu0
    %513 = vmatprep.mubr.f32.mxu0 0.0
    %514 = vmatmul.mubr.f32.gmra.mrb[0].mxu0 %v192
    %v515 = vpop.f32.mrb[0].mxu0
    %v516 = vadd.f32 0.0, %v515
    %v517 = vpop.f32.mrb[0].mxu0
    %518 = vmatprep.mubr.f32.mxu0 0.0
    %519 = vmatmul.mubr.f32.gmra.mrb[0].mxu0 %v195
    %v520 = vpop.f32.mrb[0].mxu0
    %v521 = vadd.f32 0.0, %v520
    %v522 = vpop.f32.mrb[0].mxu0
    %523 = vmatprep.mubr.f32.mxu0 0.0
    %524 = vmatmul.mubr.f32.gmra.mrb[0].mxu0 %v198
    %v525 = vpop.f32.mrb[0].mxu0
    %v526 = vadd.f32 0.0, %v525
    %v527 = vpop.f32.mrb[0].mxu0
    %528 = vmatprep.mubr.f32.mxu0 0.0
    %529 = vmatmul.mubr.f32.gmra.mrb[0].mxu0 %v201
    %v530 = vpop.f32.mrb[0].mxu0
    %v531 = vadd.f32 0.0, %v530
    %v532 = vpop.f32.mrb[0].mxu0
    %533 = vmatprep.mubr.f32.mxu0 0.0
    %534 = vmatmul.mubr.f32.gmra.mrb[0].mxu0 %v204
    %v535 = vpop.f32.mrb[0].mxu0
    %v536 = vadd.f32 0.0, %v535
    %v537 = vpop.f32.mrb[0].mxu0
    %538 = vmatprep.mubr.f32.mxu0 0.0
    %539 = vmatmul.mubr.f32.gmra.mrb[0].mxu0 %v207
    %v540 = vpop.f32.mrb[0].mxu0
    %v541 = vadd.f32 0.0, %v540
    %v542 = vpop.f32.mrb[0].mxu0
    %543 = vmatprep.mubr.f32.mxu0 0.0
    %544 = vmatmul.mubr.f32.gmra.mrb[0].mxu0 %v210
    %v545 = vpop.f32.mrb[0].mxu0
    %v546 = vadd.f32 0.0, %v545
    %v547 = vpop.f32.mrb[0].mxu0
    %548 = vmatprep.mubr.f32.mxu0 0.0
    %549 = vmatmul.mubr.f32.gmra.mrb[0].mxu0 %v213
    %v550 = vpop.f32.mrb[0].mxu0
    %v551 = vadd.f32 0.0, %v550
    %v552 = vpop.f32.mrb[0].mxu0
    %553 = vmatprep.mubr.f32.mxu0 0.0
    %554 = vmatmul.mubr.f32.gmra.mrb[0].mxu0 %v216
    %v555 = vpop.f32.mrb[0].mxu0
    %v556 = vadd.f32 0.0, %v555
    %v557 = vpop.f32.mrb[0].mxu0
    %558 = vmatprep.mubr.f32.mxu0 0.0
    %559 = vmatmul.mubr.f32.gmra.mrb[0].mxu0 %v219
    %v560 = vpop.f32.mrb[0].mxu0
    %v561 = vadd.f32 0.0, %v560
    %v562 = vpop.f32.mrb[0].mxu0
    %563 = vmatprep.mubr.f32.mxu0 0.0
    %564 = vmatmul.mubr.f32.gmra.mrb[0].mxu0 %v222
    %v565 = vpop.f32.mrb[0].mxu0
    %v566 = vadd.f32 0.0, %v565
    %v567 = vpop.f32.mrb[0].mxu0
    %568 = vmatprep.mubr.f32.mxu0 0.0
    %569 = vmatmul.mubr.f32.gmra.mrb[0].mxu0 %v225
    %v570 = vpop.f32.mrb[0].mxu0
    %v571 = vadd.f32 0.0, %v570
    %v572 = vpop.f32.mrb[0].mxu0
    %573 = vmatprep.mubr.f32.mxu0 0.0
    %574 = vmatmul.mubr.f32.gmra.mrb[0].mxu0 %v228
    %v575 = vpop.f32.mrb[0].mxu0
    %v576 = vadd.f32 0.0, %v575
    %v577 = vpop.f32.mrb[0].mxu0
    %578 = vmatprep.mubr.f32.mxu0 0.0
    %579 = vmatmul.mubr.f32.gmra.mrb[0].mxu0 %v231
    %v580 = vpop.f32.mrb[0].mxu0
    %v581 = vadd.f32 0.0, %v580
    %v582 = vpop.f32.mrb[0].mxu0
    %583 = vmatprep.mubr.f32.mxu0 0.0
    %584 = vmatmul.mubr.f32.gmra.mrb[0].mxu0 %v234
    %v585 = vpop.f32.mrb[0].mxu0
    %v586 = vadd.f32 0.0, %v585
    %v587 = vpop.f32.mrb[0].mxu0
    %588 = vmatprep.mubr.f32.mxu0 0.0
    %589 = vmatmul.mubr.f32.gmra.mrb[0].mxu0 %v237
    %v590 = vpop.f32.mrb[0].mxu0
    %v591 = vadd.f32 0.0, %v590
    %v592 = vpop.f32.mrb[0].mxu0
    %593 = vmatprep.mubr.f32.mxu0 0.0
    %594 = vmatmul.mubr.f32.gmra.mrb[0].mxu0 %v240
    %v595 = vpop.f32.mrb[0].mxu0
    %v596 = vadd.f32 0.0, %v595
    %v597 = vpop.f32.mrb[0].mxu0
    %598 = vmatprep.mubr.f32.mxu0 0.0
    %599 = vmatmul.mubr.f32.gmra.mrb[0].mxu0 %v243
    %v600 = vpop.f32.mrb[0].mxu0
    %v601 = vadd.f32 0.0, %v600
    %v602 = vpop.f32.mrb[0].mxu0
    %603 = vmatprep.mubr.f32.mxu0 0.0
    %604 = vmatmul.mubr.f32.gmra.mrb[0].mxu0 %v246
    %v605 = vpop.f32.mrb[0].mxu0
    %v606 = vadd.f32 0.0, %v605
    %v607 = vpop.f32.mrb[0].mxu0
    %608 = vmatprep.mubr.f32.mxu0 0.0
    %609 = vmatmul.mubr.f32.gmra.mrb[0].mxu0 %v249
    %v610 = vpop.f32.mrb[0].mxu0
    %v611 = vadd.f32 0.0, %v610
    %v612 = vpop.f32.mrb[0].mxu0
    %613 = vmatprep.mubr.f32.mxu0 0.0
    %614 = vmatmul.mubr.f32.gmra.mrb[0].mxu0 %v252
    %v615 = vpop.f32.mrb[0].mxu0
    %v616 = vadd.f32 0.0, %v615
    %v617 = vpop.f32.mrb[0].mxu0
    %618 = vmatprep.mubr.f32.mxu0 0.0
    %619 = vmatmul.mubr.f32.gmra.mrb[0].mxu0 %v255
    %v620 = vpop.f32.mrb[0].mxu0
    %v621 = vadd.f32 0.0, %v620
    %v622 = vpop.f32.mrb[0].mxu0
    %623 = vmatprep.mubr.f32.mxu0 0.0
    %624 = vmatmul.mubr.f32.gmra.mrb[0].mxu0 %v258
    %v625 = vpop.f32.mrb[0].mxu0
    %v626 = vadd.f32 0.0, %v625
    %v627 = vpop.f32.mrb[0].mxu0
    %628 = vmatprep.mubr.f32.mxu0 0.0
    %629 = vmatmul.mubr.f32.gmra.mrb[0].mxu0 %v261
    %v630 = vpop.f32.mrb[0].mxu0
    %v631 = vadd.f32 0.0, %v630
    %v632 = vpop.f32.mrb[0].mxu0
    %633 = vmatprep.mubr.f32.mxu0 0.0
    %634 = vmatmul.mubr.f32.gmra.mrb[0].mxu0 %v264
    %v635 = vpop.f32.mrb[0].mxu0
    %v636 = vadd.f32 0.0, %v635
    %v637 = vpop.f32.mrb[0].mxu0
    %638 = vmatprep.mubr.f32.mxu0 0.0
    %639 = vmatmul.mubr.f32.gmra.mrb[0].mxu0 %v267
    %v640 = vpop.f32.mrb[0].mxu0
    %v641 = vadd.f32 0.0, %v640
    %v642 = vpop.f32.mrb[0].mxu0
    %643 = vmatprep.mubr.f32.mxu0 0.0
    %644 = vmatmul.mubr.f32.gmra.mrb[0].mxu0 %v270
    %v645 = vpop.f32.mrb[0].mxu0
    %v646 = vadd.f32 0.0, %v645
    %v647 = vpop.f32.mrb[0].mxu0
    %648 = vmatprep.mubr.f32.mxu0 0.0
    %649 = vmatmul.mubr.f32.gmra.mrb[0].mxu0 %v273
    %v650 = vpop.f32.mrb[0].mxu0
    %v651 = vadd.f32 0.0, %v650
    %v652 = vpop.f32.mrb[0].mxu0
    %653 = vmatprep.mubr.f32.mxu0 0.0
    %654 = vmatmul.mubr.f32.gmra.mrb[0].mxu0 %v276
    %v655 = vpop.f32.mrb[0].mxu0
    %v656 = vadd.f32 0.0, %v655
    %v657 = vpop.f32.mrb[0].mxu0
    %658 = vmatprep.mubr.f32.mxu0 0.0
    %659 = vmatmul.mubr.f32.gmra.mrb[0].mxu0 %v279
    %v660 = vpop.f32.mrb[0].mxu0
    %v661 = vadd.f32 0.0, %v660
    %v662 = vpop.f32.mrb[0].mxu0
    %663 = vmatprep.mubr.f32.mxu0 0.0
    %664 = vmatmul.mubr.f32.gmra.mrb[0].mxu0 %v282
    %v665 = vpop.f32.mrb[0].mxu0
    %v666 = vadd.f32 0.0, %v665
    %v667 = vpop.f32.mrb[0].mxu0
    %668 = vdwg.mxu0
    %vm669 = vcmp.ge.f32.partialorder %v351, 0.0
    %vm670 = vcmp.ge.f32.partialorder %v356, 0.0
    %vm671 = vcmp.ge.f32.partialorder %v361, 0.0
    %vm672 = vcmp.ge.f32.partialorder %v366, 0.0
    %vm673 = vcmp.ge.f32.partialorder %v371, 0.0
    %vm674 = vcmp.ge.f32.partialorder %v376, 0.0
    %vm675 = vcmp.ge.f32.partialorder %v381, 0.0
    %vm676 = vcmp.ge.f32.partialorder %v386, 0.0
    %vm677 = vcmp.ge.f32.partialorder %v391, 0.0
    %vm678 = vcmp.ge.f32.partialorder %v396, 0.0
    %vm679 = vcmp.ge.f32.partialorder %v401, 0.0
    %vm680 = vcmp.ge.f32.partialorder %v406, 0.0
    %vm681 = vcmp.ge.f32.partialorder %v411, 0.0
    %vm682 = vcmp.ge.f32.partialorder %v416, 0.0
    %vm683 = vcmp.ge.f32.partialorder %v421, 0.0
    %vm684 = vcmp.ge.f32.partialorder %v426, 0.0
    %vm685 = vcmp.ge.f32.partialorder %v431, 0.0
    %vm686 = vcmp.ge.f32.partialorder %v436, 0.0
    %vm687 = vcmp.ge.f32.partialorder %v441, 0.0
    %vm688 = vcmp.ge.f32.partialorder %v446, 0.0
    %vm689 = vcmp.ge.f32.partialorder %v451, 0.0
    %vm690 = vcmp.ge.f32.partialorder %v456, 0.0
    %vm691 = vcmp.ge.f32.partialorder %v461, 0.0
    %vm692 = vcmp.ge.f32.partialorder %v466, 0.0
    %vm693 = vcmp.ge.f32.partialorder %v471, 0.0
    %vm694 = vcmp.ge.f32.partialorder %v476, 0.0
    %vm695 = vcmp.ge.f32.partialorder %v481, 0.0
    %vm696 = vcmp.ge.f32.partialorder %v486, 0.0
    %vm697 = vcmp.ge.f32.partialorder %v491, 0.0
    %vm698 = vcmp.ge.f32.partialorder %v496, 0.0
    %vm699 = vcmp.ge.f32.partialorder %v501, 0.0
    %vm700 = vcmp.ge.f32.partialorder %v506, 0.0
    %vm701 = vcmp.ge.f32.partialorder %v511, 0.0
    %vm702 = vcmp.ge.f32.partialorder %v516, 0.0
    %vm703 = vcmp.ge.f32.partialorder %v521, 0.0
    %vm704 = vcmp.ge.f32.partialorder %v526, 0.0
    %vm705 = vcmp.ge.f32.partialorder %v531, 0.0
    %vm706 = vcmp.ge.f32.partialorder %v536, 0.0
    %vm707 = vcmp.ge.f32.partialorder %v541, 0.0
    %vm708 = vcmp.ge.f32.partialorder %v546, 0.0
    %vm709 = vcmp.ge.f32.partialorder %v551, 0.0
    %vm710 = vcmp.ge.f32.partialorder %v556, 0.0
    %vm711 = vcmp.ge.f32.partialorder %v561, 0.0
    %vm712 = vcmp.ge.f32.partialorder %v566, 0.0
    %vm713 = vcmp.ge.f32.partialorder %v571, 0.0
    %vm714 = vcmp.ge.f32.partialorder %v576, 0.0
    %vm715 = vcmp.ge.f32.partialorder %v581, 0.0
    %vm716 = vcmp.ge.f32.partialorder %v586, 0.0
    %vm717 = vcmp.ge.f32.partialorder %v591, 0.0
    %vm718 = vcmp.ge.f32.partialorder %v596, 0.0
    %vm719 = vcmp.ge.f32.partialorder %v601, 0.0
    %vm720 = vcmp.ge.f32.partialorder %v606, 0.0
    %vm721 = vcmp.ge.f32.partialorder %v611, 0.0
    %vm722 = vcmp.ge.f32.partialorder %v616, 0.0
    %vm723 = vcmp.ge.f32.partialorder %v621, 0.0
    %vm724 = vcmp.ge.f32.partialorder %v626, 0.0
    %vm725 = vcmp.ge.f32.partialorder %v631, 0.0
    %vm726 = vcmp.ge.f32.partialorder %v636, 0.0
    %vm727 = vcmp.ge.f32.partialorder %v641, 0.0
    %vm728 = vcmp.ge.f32.partialorder %v646, 0.0
    %vm729 = vcmp.ge.f32.partialorder %v651, 0.0
    %vm730 = vcmp.ge.f32.partialorder %v656, 0.0
    %vm731 = vcmp.ge.f32.partialorder %v661, 0.0
    %vm732 = vcmp.ge.f32.partialorder %v666, 0.0
    %v733 = vmul.f32 %v351, 0.2
    %v734 = vmul.f32 %v356, 0.2
    %v735 = vmul.f32 %v361, 0.2
    %v736 = vmul.f32 %v366, 0.2
    %v737 = vmul.f32 %v371, 0.2
    %v738 = vmul.f32 %v376, 0.2
    %v739 = vmul.f32 %v381, 0.2
    %v740 = vmul.f32 %v386, 0.2
    %v741 = vmul.f32 %v391, 0.2
    %v742 = vmul.f32 %v396, 0.2
    %v743 = vmul.f32 %v401, 0.2
    %v744 = vmul.f32 %v406, 0.2
    %v745 = vmul.f32 %v411, 0.2
    %v746 = vmul.f32 %v416, 0.2
    %v747 = vmul.f32 %v421, 0.2
    %v748 = vmul.f32 %v426, 0.2
    %v749 = vmul.f32 %v431, 0.2
    %v750 = vmul.f32 %v436, 0.2
    %v751 = vmul.f32 %v441, 0.2
    %v752 = vmul.f32 %v446, 0.2
    %v753 = vmul.f32 %v451, 0.2
    %v754 = vmul.f32 %v456, 0.2
    %v755 = vmul.f32 %v461, 0.2
    %v756 = vmul.f32 %v466, 0.2
    %v757 = vmul.f32 %v471, 0.2
    %v758 = vmul.f32 %v476, 0.2
    %v759 = vmul.f32 %v481, 0.2
    %v760 = vmul.f32 %v486, 0.2
    %v761 = vmul.f32 %v491, 0.2
    %v762 = vmul.f32 %v496, 0.2
    %v763 = vmul.f32 %v501, 0.2
    %v764 = vmul.f32 %v506, 0.2
    %v765 = vmul.f32 %v511, 0.2
    %v766 = vmul.f32 %v516, 0.2
    %v767 = vmul.f32 %v521, 0.2
    %v768 = vmul.f32 %v526, 0.2
    %v769 = vmul.f32 %v531, 0.2
    %v770 = vmul.f32 %v536, 0.2
    %v771 = vmul.f32 %v541, 0.2
    %v772 = vmul.f32 %v546, 0.2
    %v773 = vmul.f32 %v551, 0.2
    %v774 = vmul.f32 %v556, 0.2
    %v775 = vmul.f32 %v561, 0.2
    %v776 = vmul.f32 %v566, 0.2
    %v777 = vmul.f32 %v571, 0.2
    %v778 = vmul.f32 %v576, 0.2
    %v779 = vmul.f32 %v581, 0.2
    %v780 = vmul.f32 %v586, 0.2
    %v781 = vmul.f32 %v591, 0.2
    %v782 = vmul.f32 %v596, 0.2
    %v783 = vmul.f32 %v601, 0.2
    %v784 = vmul.f32 %v606, 0.2
    %v785 = vmul.f32 %v611, 0.2
    %v786 = vmul.f32 %v616, 0.2
    %v787 = vmul.f32 %v621, 0.2
    %v788 = vmul.f32 %v626, 0.2
    %v789 = vmul.f32 %v631, 0.2
    %v790 = vmul.f32 %v636, 0.2
    %v791 = vmul.f32 %v641, 0.2
    %v792 = vmul.f32 %v646, 0.2
    %v793 = vmul.f32 %v651, 0.2
    %v794 = vmul.f32 %v656, 0.2
    %v795 = vmul.f32 %v661, 0.2
    %v796 = vmul.f32 %v666, 0.2
    %v797 = vsel %vm669, %v351, %v733
    %v798 = vsel %vm670, %v356, %v734
    %v799 = vsel %vm671, %v361, %v735
    %v800 = vsel %vm672, %v366, %v736
    %v801 = vsel %vm673, %v371, %v737
    %v802 = vsel %vm674, %v376, %v738
    %v803 = vsel %vm675, %v381, %v739
    %v804 = vsel %vm676, %v386, %v740
    %v805 = vsel %vm677, %v391, %v741
    %v806 = vsel %vm678, %v396, %v742
    %v807 = vsel %vm679, %v401, %v743
    %v808 = vsel %vm680, %v406, %v744
    %v809 = vsel %vm681, %v411, %v745
    %v810 = vsel %vm682, %v416, %v746
    %v811 = vsel %vm683, %v421, %v747
    %v812 = vsel %vm684, %v426, %v748
    %v813 = vsel %vm685, %v431, %v749
    %v814 = vsel %vm686, %v436, %v750
    %v815 = vsel %vm687, %v441, %v751
    %v816 = vsel %vm688, %v446, %v752
    %v817 = vsel %vm689, %v451, %v753
    %v818 = vsel %vm690, %v456, %v754
    %v819 = vsel %vm691, %v461, %v755
    %v820 = vsel %vm692, %v466, %v756
    %v821 = vsel %vm693, %v471, %v757
    %v822 = vsel %vm694, %v476, %v758
    %v823 = vsel %vm695, %v481, %v759
    %v824 = vsel %vm696, %v486, %v760
    %v825 = vsel %vm697, %v491, %v761
    %v826 = vsel %vm698, %v496, %v762
    %v827 = vsel %vm699, %v501, %v763
    %v828 = vsel %vm700, %v506, %v764
    %v829 = vsel %vm701, %v511, %v765
    %v830 = vsel %vm702, %v516, %v766
    %v831 = vsel %vm703, %v521, %v767
    %v832 = vsel %vm704, %v526, %v768
    %v833 = vsel %vm705, %v531, %v769
    %v834 = vsel %vm706, %v536, %v770
    %v835 = vsel %vm707, %v541, %v771
    %v836 = vsel %vm708, %v546, %v772
    %v837 = vsel %vm709, %v551, %v773
    %v838 = vsel %vm710, %v556, %v774
    %v839 = vsel %vm711, %v561, %v775
    %v840 = vsel %vm712, %v566, %v776
    %v841 = vsel %vm713, %v571, %v777
    %v842 = vsel %vm714, %v576, %v778
    %v843 = vsel %vm715, %v581, %v779
    %v844 = vsel %vm716, %v586, %v780
    %v845 = vsel %vm717, %v591, %v781
    %v846 = vsel %vm718, %v596, %v782
    %v847 = vsel %vm719, %v601, %v783
    %v848 = vsel %vm720, %v606, %v784
    %v849 = vsel %vm721, %v611, %v785
    %v850 = vsel %vm722, %v616, %v786
    %v851 = vsel %vm723, %v621, %v787
    %v852 = vsel %vm724, %v626, %v788
    %v853 = vsel %vm725, %v631, %v789
    %v854 = vsel %vm726, %v636, %v790
    %v855 = vsel %vm727, %v641, %v791
    %v856 = vsel %vm728, %v646, %v792
    %v857 = vsel %vm729, %v651, %v793
    %v858 = vsel %vm730, %v656, %v794
    %v859 = vsel %vm731, %v661, %v795
    %v860 = vsel %vm732, %v666, %v796
    %865 = vrot.lane.b32.xlu0 %v801, 8
    %v866 = vpop.permute.xlu0 %865
    %867 = vrot.lane.b32.xlu0 %v802, 8
    %v868 = vpop.permute.xlu0 %867
    %869 = vrot.lane.b32.xlu0 %v803, 8
    %v870 = vpop.permute.xlu0 %869
    %871 = vrot.lane.b32.xlu0 %v804, 8
    %v872 = vpop.permute.xlu0 %871
    %881 = vrot.lane.b32.xlu0 %v805, 16
    %v882 = vpop.permute.xlu0 %881
    %883 = vrot.lane.b32.xlu0 %v806, 16
    %v884 = vpop.permute.xlu0 %883
    %885 = vrot.lane.b32.xlu0 %v807, 16
    %v886 = vpop.permute.xlu0 %885
    %887 = vrot.lane.b32.xlu0 %v808, 16
    %v888 = vpop.permute.xlu0 %887
    %897 = vrot.lane.b32.xlu0 %v809, 24
    %v898 = vpop.permute.xlu0 %897
    %899 = vrot.lane.b32.xlu0 %v810, 24
    %v900 = vpop.permute.xlu0 %899
    %901 = vrot.lane.b32.xlu0 %v811, 24
    %v902 = vpop.permute.xlu0 %901
    %903 = vrot.lane.b32.xlu0 %v812, 24
    %v904 = vpop.permute.xlu0 %903
    %913 = vrot.lane.b32.xlu0 %v813, 32
    %v914 = vpop.permute.xlu0 %913
    %915 = vrot.lane.b32.xlu0 %v814, 32
    %v916 = vpop.permute.xlu0 %915
    %917 = vrot.lane.b32.xlu0 %v815, 32
    %v918 = vpop.permute.xlu0 %917
    %919 = vrot.lane.b32.xlu0 %v816, 32
    %v920 = vpop.permute.xlu0 %919
    %929 = vrot.lane.b32.xlu0 %v817, 40
    %v930 = vpop.permute.xlu0 %929
    %931 = vrot.lane.b32.xlu0 %v818, 40
    %v932 = vpop.permute.xlu0 %931
    %933 = vrot.lane.b32.xlu0 %v819, 40
    %v934 = vpop.permute.xlu0 %933
    %935 = vrot.lane.b32.xlu0 %v820, 40
    %v936 = vpop.permute.xlu0 %935
    %945 = vrot.lane.b32.xlu0 %v821, 48
    %v946 = vpop.permute.xlu0 %945
    %947 = vrot.lane.b32.xlu0 %v822, 48
    %v948 = vpop.permute.xlu0 %947
    %949 = vrot.lane.b32.xlu0 %v823, 48
    %v950 = vpop.permute.xlu0 %949
    %951 = vrot.lane.b32.xlu0 %v824, 48
    %v952 = vpop.permute.xlu0 %951
    %961 = vrot.lane.b32.xlu0 %v825, 56
    %v962 = vpop.permute.xlu0 %961
    %963 = vrot.lane.b32.xlu0 %v826, 56
    %v964 = vpop.permute.xlu0 %963
    %965 = vrot.lane.b32.xlu0 %v827, 56
    %v966 = vpop.permute.xlu0 %965
    %967 = vrot.lane.b32.xlu0 %v828, 56
    %v968 = vpop.permute.xlu0 %967
    %977 = vrot.lane.b32.xlu0 %v829, 64
    %v978 = vpop.permute.xlu0 %977
    %979 = vrot.lane.b32.xlu0 %v830, 64
    %v980 = vpop.permute.xlu0 %979
    %981 = vrot.lane.b32.xlu0 %v831, 64
    %v982 = vpop.permute.xlu0 %981
    %983 = vrot.lane.b32.xlu0 %v832, 64
    %v984 = vpop.permute.xlu0 %983
    %993 = vrot.lane.b32.xlu0 %v833, 72
    %v994 = vpop.permute.xlu0 %993
    %995 = vrot.lane.b32.xlu0 %v834, 72
    %v996 = vpop.permute.xlu0 %995
    %997 = vrot.lane.b32.xlu0 %v835, 72
    %v998 = vpop.permute.xlu0 %997
    %999 = vrot.lane.b32.xlu0 %v836, 72
    %v1000 = vpop.permute.xlu0 %999
    %1009 = vrot.lane.b32.xlu0 %v837, 80
    %v1010 = vpop.permute.xlu0 %1009
    %1011 = vrot.lane.b32.xlu0 %v838, 80
    %v1012 = vpop.permute.xlu0 %1011
    %1013 = vrot.lane.b32.xlu0 %v839, 80
    %v1014 = vpop.permute.xlu0 %1013
    %1015 = vrot.lane.b32.xlu0 %v840, 80
    %v1016 = vpop.permute.xlu0 %1015
    %1025 = vrot.lane.b32.xlu0 %v841, 88
    %v1026 = vpop.permute.xlu0 %1025
    %1027 = vrot.lane.b32.xlu0 %v842, 88
    %v1028 = vpop.permute.xlu0 %1027
    %1029 = vrot.lane.b32.xlu0 %v843, 88
    %v1030 = vpop.permute.xlu0 %1029
    %1031 = vrot.lane.b32.xlu0 %v844, 88
    %v1032 = vpop.permute.xlu0 %1031
    %1041 = vrot.lane.b32.xlu0 %v845, 96
    %v1042 = vpop.permute.xlu0 %1041
    %1043 = vrot.lane.b32.xlu0 %v846, 96
    %v1044 = vpop.permute.xlu0 %1043
    %1045 = vrot.lane.b32.xlu0 %v847, 96
    %v1046 = vpop.permute.xlu0 %1045
    %1047 = vrot.lane.b32.xlu0 %v848, 96
    %v1048 = vpop.permute.xlu0 %1047
    %1057 = vrot.lane.b32.xlu0 %v849, 104
    %v1058 = vpop.permute.xlu0 %1057
    %1059 = vrot.lane.b32.xlu0 %v850, 104
    %v1060 = vpop.permute.xlu0 %1059
    %1061 = vrot.lane.b32.xlu0 %v851, 104
    %v1062 = vpop.permute.xlu0 %1061
    %1063 = vrot.lane.b32.xlu0 %v852, 104
    %v1064 = vpop.permute.xlu0 %1063
    %1073 = vrot.lane.b32.xlu0 %v853, 112
    %v1074 = vpop.permute.xlu0 %1073
    %1075 = vrot.lane.b32.xlu0 %v854, 112
    %v1076 = vpop.permute.xlu0 %1075
    %1077 = vrot.lane.b32.xlu0 %v855, 112
    %v1078 = vpop.permute.xlu0 %1077
    %1079 = vrot.lane.b32.xlu0 %v856, 112
    %v1080 = vpop.permute.xlu0 %1079
    %1089 = vrot.lane.b32.xlu0 %v857, 120
    %v1090 = vpop.permute.xlu0 %1089
    %1091 = vrot.lane.b32.xlu0 %v858, 120
    %v1092 = vpop.permute.xlu0 %1091
    %1093 = vrot.lane.b32.xlu0 %v859, 120
    %v1094 = vpop.permute.xlu0 %1093
    %1095 = vrot.lane.b32.xlu0 %v860, 120
    %v1096 = vpop.permute.xlu0 %1095
    %vm1101 = vcmask 64512
    %v1102 = vsel %vm1101, %v797, %v866
    %v1103 = vsel %vm1101, %v798, %v868
    %v1104 = vsel %vm1101, %v799, %v870
    %v1105 = vsel %vm1101, %v800, %v872
    %vm1106 = vcmask 130048
    %v1107 = vsel %vm1106, %v1102, %v882
    %v1108 = vsel %vm1106, %v1103, %v884
    %v1109 = vsel %vm1106, %v1104, %v886
    %v1110 = vsel %vm1106, %v1105, %v888
    %vm1111 = vcmask 195584
    %v1112 = vsel %vm1111, %v1107, %v898
    %v1113 = vsel %vm1111, %v1108, %v900
    %v1114 = vsel %vm1111, %v1109, %v902
    %v1115 = vsel %vm1111, %v1110, %v904
    %vm1116 = vcmask 261120
    %v1117 = vsel %vm1116, %v1112, %v914
    %v1118 = vsel %vm1116, %v1113, %v916
    %v1119 = vsel %vm1116, %v1114, %v918
    %v1120 = vsel %vm1116, %v1115, %v920
    %vm1121 = vcmask 326656
    %v1122 = vsel %vm1121, %v1117, %v930
    %v1123 = vsel %vm1121, %v1118, %v932
    %v1124 = vsel %vm1121, %v1119, %v934
    %v1125 = vsel %vm1121, %v1120, %v936
    %v1126 = vsel %vm91, %v1122, %v946
    %v1127 = vsel %vm91, %v1123, %v948
    %v1128 = vsel %vm91, %v1124, %v950
    %v1129 = vsel %vm91, %v1125, %v952
    %vm1130 = vcmask 457728
    %v1131 = vsel %vm1130, %v1126, %v962
    %v1132 = vsel %vm1130, %v1127, %v964
    %v1133 = vsel %vm1130, %v1128, %v966
    %v1134 = vsel %vm1130, %v1129, %v968
    %vm1135 = vcmask 523264
    %v1136 = vsel %vm1135, %v1131, %v978
    %v1137 = vsel %vm1135, %v1132, %v980
    %v1138 = vsel %vm1135, %v1133, %v982
    %v1139 = vsel %vm1135, %v1134, %v984
    %vm1140 = vcmask 588800
    %v1141 = vsel %vm1140, %v1136, %v994
    %v1142 = vsel %vm1140, %v1137, %v996
    %v1143 = vsel %vm1140, %v1138, %v998
    %v1144 = vsel %vm1140, %v1139, %v1000
    %vm1145 = vcmask 654336
    %v1146 = vsel %vm1145, %v1141, %v1010
    %v1147 = vsel %vm1145, %v1142, %v1012
    %v1148 = vsel %vm1145, %v1143, %v1014
    %v1149 = vsel %vm1145, %v1144, %v1016
    %vm1150 = vcmask 719872
    %v1151 = vsel %vm1150, %v1146, %v1026
    %v1152 = vsel %vm1150, %v1147, %v1028
    %v1153 = vsel %vm1150, %v1148, %v1030
    %v1154 = vsel %vm1150, %v1149, %v1032
    %vm1155 = vcmask 785408
    %v1156 = vsel %vm1155, %v1151, %v1042
    %v1157 = vsel %vm1155, %v1152, %v1044
    %v1158 = vsel %vm1155, %v1153, %v1046
    %v1159 = vsel %vm1155, %v1154, %v1048
    %vm1160 = vcmask 850944
    %v1161 = vsel %vm1160, %v1156, %v1058
    %v1162 = vsel %vm1160, %v1157, %v1060
    %v1163 = vsel %vm1160, %v1158, %v1062
    %v1164 = vsel %vm1160, %v1159, %v1064
    %vm1165 = vcmask 916480
    %v1166 = vsel %vm1165, %v1161, %v1074
    %v1167 = vsel %vm1165, %v1162, %v1076
    %v1168 = vsel %vm1165, %v1163, %v1078
    %v1169 = vsel %vm1165, %v1164, %v1080
    %vm1170 = vcmask 982016
    %v1171 = vsel %vm1170, %v1166, %v1090
    %v1172 = vsel %vm1170, %v1167, %v1092
    %v1173 = vsel %vm1170, %v1168, %v1094
    %v1174 = vsel %vm1170, %v1169, %v1096
    %v1175 = vld [vmem:[%s2] sm:$0xff]
    %v1176 = vld [vmem:[%s2 + $0x8] sm:$0xff]
    %v1177 = vld [vmem:[%s2 + $0x10] sm:$0xff]
    %v1178 = vld [vmem:[%s2 + $0x18] sm:$0xff]
    %v1179 = vld [vmem:[%s2 + $0x20] sm:$0xff]
    %v1180 = vld [vmem:[%s2 + $0x28] sm:$0xff]
    %v1181 = vld [vmem:[%s2 + $0x30] sm:$0xff]
    %v1182 = vld [vmem:[%s2 + $0x38] sm:$0xff]
    %v1183 = vld [vmem:[%s2 + $0x40] sm:$0xff]
    %v1184 = vld [vmem:[%s2 + $0x48] sm:$0xff]
    %v1185 = vld [vmem:[%s2 + $0x50] sm:$0xff]
    %v1186 = vld [vmem:[%s2 + $0x58] sm:$0xff]
    %v1187 = vld [vmem:[%s2 + $0x60] sm:$0xff]
    %v1188 = vld [vmem:[%s2 + $0x68] sm:$0xff]
    %v1189 = vld [vmem:[%s2 + $0x70] sm:$0xff]
    %v1190 = vld [vmem:[%s2 + $0x78] sm:$0xff]
    %1191 = vmatprep.subr.mxu0 0.0
    %1192 = vmatpush1.msra.mxu0 %v1175
    %1193 = vmatprep.subr.mxu0 0.0
    %1194 = vmatpush1.msra.mxu0 %v1176
    %1195 = vmatprep.subr.mxu0 0.0
    %1196 = vmatpush1.msra.mxu0 %v1177
    %1197 = vmatprep.subr.mxu0 0.0
    %1198 = vmatpush1.msra.mxu0 %v1178
    %1199 = vmatprep.subr.mxu0 0.0
    %1200 = vmatpush1.msra.mxu0 %v1179
    %1201 = vmatprep.subr.mxu0 0.0
    %1202 = vmatpush1.msra.mxu0 %v1180
    %1203 = vmatprep.subr.mxu0 0.0
    %1204 = vmatpush1.msra.mxu0 %v1181
    %1205 = vmatprep.subr.mxu0 0.0
    %1206 = vmatpush1.msra.mxu0 %v1182
    %1207 = vmatprep.subr.mxu0 0.0
    %1208 = vmatpush1.msra.mxu0 %v1183
    %1209 = vmatprep.subr.mxu0 0.0
    %1210 = vmatpush1.msra.mxu0 %v1184
    %1211 = vmatprep.subr.mxu0 0.0
    %1212 = vmatpush1.msra.mxu0 %v1185
    %1213 = vmatprep.subr.mxu0 0.0
    %1214 = vmatpush1.msra.mxu0 %v1186
    %1215 = vmatprep.subr.mxu0 0.0
    %1216 = vmatpush1.msra.mxu0 %v1187
    %1217 = vmatprep.subr.mxu0 0.0
    %1218 = vmatpush1.msra.mxu0 %v1188
    %1219 = vmatprep.subr.mxu0 0.0
    %1220 = vmatpush1.msra.mxu0 %v1189
    %1221 = vmatprep.subr.mxu0 0.0
    %1222 = vmatpush1.msra.mxu0 %v1190
    %1223 = vmatprep.subr.mxu0 0.0
    %1224 = vmatpush1.msra.mxu0 0.0
    %1225 = vmatprep.subr.mxu0 0.0
    %1226 = vmatpush1.msra.mxu0 0.0
    %1227 = vmatprep.subr.mxu0 0.0
    %1228 = vmatpush1.msra.mxu0 0.0
    %1229 = vmatprep.subr.mxu0 0.0
    %1230 = vmatpush1.msra.mxu0 0.0
    %1231 = vmatprep.subr.mxu0 0.0
    %1232 = vmatpush1.msra.mxu0 0.0
    %1233 = vmatprep.subr.mxu0 0.0
    %1234 = vmatpush1.msra.mxu0 0.0
    %1235 = vmatprep.subr.mxu0 0.0
    %1236 = vmatpush1.msra.mxu0 0.0
    %1237 = vmatprep.subr.mxu0 0.0
    %1238 = vmatpush1.msra.mxu0 0.0
    %1239 = vmatprep.subr.mxu0 0.0
    %1240 = vmatpush1.msra.mxu0 0.0
    %1241 = vmatprep.subr.mxu0 0.0
    %1242 = vmatpush1.msra.mxu0 0.0
    %1243 = vmatprep.subr.mxu0 0.0
    %1244 = vmatpush1.msra.mxu0 0.0
    %1245 = vmatprep.subr.mxu0 0.0
    %1246 = vmatpush1.msra.mxu0 0.0
    %1247 = vmatprep.subr.mxu0 0.0
    %1248 = vmatpush1.msra.mxu0 0.0
    %1249 = vmatprep.subr.mxu0 0.0
    %1250 = vmatpush1.msra.mxu0 0.0
    %1251 = vmatprep.subr.mxu0 0.0
    %1252 = vmatpush1.msra.mxu0 0.0
    %1253 = vmatprep.subr.mxu0 0.0
    %1254 = vmatpush1.msra.mxu0 0.0
    %1255 = vmatprep.mubr.f32.mxu0 0.0
    %1256 = vmatmul.mubr.f32.gmra.mrb[0].mxu0 %v1171
    %v1257 = vpop.f32.mrb[0].mxu0
    %v1258 = vadd.f32 0.0, %v1257
    %v1259 = vpop.f32.mrb[0].mxu0
    %1260 = vmatprep.mubr.f32.mxu0 0.0
    %1261 = vmatmul.mubr.f32.gmra.mrb[0].mxu0 %v1172
    %v1262 = vpop.f32.mrb[0].mxu0
    %v1263 = vadd.f32 0.0, %v1262
    %v1264 = vpop.f32.mrb[0].mxu0
    %1265 = vmatprep.mubr.f32.mxu0 0.0
    %1266 = vmatmul.mubr.f32.gmra.mrb[0].mxu0 %v1173
    %v1267 = vpop.f32.mrb[0].mxu0
    %v1268 = vadd.f32 0.0, %v1267
    %v1269 = vpop.f32.mrb[0].mxu0
    %1270 = vmatprep.mubr.f32.mxu0 0.0
    %1271 = vmatmul.mubr.f32.gmra.mrb[0].mxu0 %v1174
    %v1272 = vpop.f32.mrb[0].mxu0
    %v1273 = vadd.f32 0.0, %v1272
    %v1274 = vpop.f32.mrb[0].mxu0
    %1275 = vdwg.mxu0
    %v1276 = vsel %vm1106, %v1258, 0.0
    %v1277 = vsel %vm1106, %v1263, 0.0
    %v1278 = vadd.f32 %v1276, %v1277
    %v1279 = vsel %vm1106, %v1268, 0.0
    %v1280 = vadd.f32 %v1278, %v1279
    %v1281 = vsel %vm1106, %v1273, 0.0
    %v1282 = vadd.f32 %v1280, %v1281
    %v1283 = vrot.slane %v1282, 4
    %v1284 = vadd.f32 %v1282, %v1283
    %v1285 = vrot.slane %v1284, 2
    %v1286 = vadd.f32 %v1284, %v1285
    %v1287 = vrot.slane %v1286, 1
    %v1288 = vadd.f32 %v1286, %v1287
    %v1289 = vmul.f32 %v1288, 0.03125
    %v1290 = vsub.f32 %v1258, %v1289
    %v1291 = vsub.f32 %v1263, %v1289
    %v1292 = vsub.f32 %v1268, %v1289
    %v1293 = vsub.f32 %v1273, %v1289
    %v1294 = vmul.f32 %v1290, %v1290
    %v1295 = vmul.f32 %v1291, %v1291
    %v1296 = vmul.f32 %v1292, %v1292
    %v1297 = vmul.f32 %v1293, %v1293
    %v1298 = vsel %vm1106, %v1294, 0.0
    %v1299 = vsel %vm1106, %v1295, 0.0
    %v1300 = vadd.f32 %v1298, %v1299
    %v1301 = vsel %vm1106, %v1296, 0.0
    %v1302 = vadd.f32 %v1300, %v1301
    %v1303 = vsel %vm1106, %v1297, 0.0
    %v1304 = vadd.f32 %v1302, %v1303
    %v1305 = vrot.slane %v1304, 4
    %v1306 = vadd.f32 %v1304, %v1305
    %v1307 = vrot.slane %v1306, 2
    %v1308 = vadd.f32 %v1306, %v1307
    %v1309 = vrot.slane %v1308, 1
    %v1310 = vadd.f32 %v1308, %v1309
    %v1311 = vmul.f32 %v1310, 0.03125
    %v1312 = vld [vmem:[%s3] sm:$0x1]
    %v1313 = vadd.f32 %v1311, 1e-05
    %v1314 = vrsqrt.pop %v1313
    %v1315 = vmul.f32 %v1312, %v1314
    %v1316 = vlaneseq
    %v1317 = vshrl.u32 %v1316, 7
    %v1318 = vsub.s32 0, %v1317
    %v1319 = vrot.slane %v1315, %v1318
    %v1320 = vmul.f32 %v1290, %v1319
    %v1321 = vmul.f32 %v1291, %v1319
    %v1322 = vmul.f32 %v1292, %v1319
    %v1323 = vmul.f32 %v1293, %v1319
    %v1324 = vld [vmem:[%s3 + $0x1] sm:$0x1]
    %v1325 = vlaneseq
    %v1326 = vshrl.u32 %v1325, 7
    %v1327 = vsub.s32 0, %v1326
    %v1328 = vrot.slane %v1324, %v1327
    %v1329 = vadd.f32 %v1320, %v1328
    %v1330 = vadd.f32 %v1321, %v1328
    %v1331 = vadd.f32 %v1322, %v1328
    %v1332 = vadd.f32 %v1323, %v1328
    %vm1333 = vcmp.ge.f32.partialorder %v1329, 0.0
    %vm1334 = vcmp.ge.f32.partialorder %v1330, 0.0
    %vm1335 = vcmp.ge.f32.partialorder %v1331, 0.0
    %vm1336 = vcmp.ge.f32.partialorder %v1332, 0.0
    %v1337 = vmul.f32 %v1329, 0.2
    %v1338 = vmul.f32 %v1330, 0.2
    %v1339 = vmul.f32 %v1331, 0.2
    %v1340 = vmul.f32 %v1332, 0.2
    %v1341 = vsel %vm1333, %v1329, %v1337
    %v1342 = vsel %vm1334, %v1330, %v1338
    %v1343 = vsel %vm1335, %v1331, %v1339
    %v1344 = vsel %vm1336, %v1332, %v1340
    %v1346 = vrot.slane %v1341, 2
    %1347 = vrot.lane.b32.xlu0 %v1346, 16
    %v1348 = vpop.permute.xlu0 %1347
    %v1350 = vrot.slane %v1341, 4
    %1351 = vrot.lane.b32.xlu0 %v1350, 32
    %v1352 = vpop.permute.xlu0 %1351
    %v1354 = vrot.slane %v1341, 6
    %1355 = vrot.lane.b32.xlu0 %v1354, 48
    %v1356 = vpop.permute.xlu0 %1355
    %1359 = vrot.lane.b32.xlu0 %v1342, 64
    %v1360 = vpop.permute.xlu0 %1359
    %v1362 = vrot.slane %v1342, 2
    %1363 = vrot.lane.b32.xlu0 %v1362, 80
    %v1364 = vpop.permute.xlu0 %1363
    %v1366 = vrot.slane %v1342, 4
    %1367 = vrot.lane.b32.xlu0 %v1366, 96
    %v1368 = vpop.permute.xlu0 %1367
    %v1370 = vrot.slane %v1342, 6
    %1371 = vrot.lane.b32.xlu0 %v1370, 112
    %v1372 = vpop.permute.xlu0 %1371
    %v1375 = vrot.slane %v1343, 2
    %1376 = vrot.lane.b32.xlu0 %v1375, 16
    %v1377 = vpop.permute.xlu0 %1376
    %v1379 = vrot.slane %v1343, 4
    %1380 = vrot.lane.b32.xlu0 %v1379, 32
    %v1381 = vpop.permute.xlu0 %1380
    %v1383 = vrot.slane %v1343, 6
    %1384 = vrot.lane.b32.xlu0 %v1383, 48
    %v1385 = vpop.permute.xlu0 %1384
    %1388 = vrot.lane.b32.xlu0 %v1344, 64
    %v1389 = vpop.permute.xlu0 %1388
    %v1391 = vrot.slane %v1344, 2
    %1392 = vrot.lane.b32.xlu0 %v1391, 80
    %v1393 = vpop.permute.xlu0 %1392
    %v1395 = vrot.slane %v1344, 4
    %1396 = vrot.lane.b32.xlu0 %v1395, 96
    %v1397 = vpop.permute.xlu0 %1396
    %v1399 = vrot.slane %v1344, 6
    %1400 = vrot.lane.b32.xlu0 %v1399, 112
    %v1401 = vpop.permute.xlu0 %1400
    %v1403 = vsel %vm1106, %v1341, %v1348
    %v1404 = vsel %vm1116, %v1403, %v1352
    %v1405 = vsel %vm91, %v1404, %v1356
    %v1406 = vsel %vm1135, %v1405, %v1360
    %v1407 = vsel %vm1145, %v1406, %v1364
    %v1408 = vsel %vm1155, %v1407, %v1368
    %v1409 = vsel %vm1165, %v1408, %v1372
    %v1410 = vsel %vm1106, %v1343, %v1377
    %v1411 = vsel %vm1116, %v1410, %v1381
    %v1412 = vsel %vm91, %v1411, %v1385
    %v1413 = vsel %vm1135, %v1412, %v1389
    %v1414 = vsel %vm1145, %v1413, %v1393
    %v1415 = vsel %vm1155, %v1414, %v1397
    %v1416 = vsel %vm1165, %v1415, %v1401
    %v1417 = vld [vmem:[%s4] sm:$0xff]
    %v1418 = vld [vmem:[%s4 + $0x8] sm:$0xff]
    %v1419 = vld [vmem:[%s4 + $0x10] sm:$0xff]
    %v1420 = vld [vmem:[%s4 + $0x18] sm:$0xff]
    %v1421 = vld [vmem:[%s4 + $0x20] sm:$0xff]
    %v1422 = vld [vmem:[%s4 + $0x28] sm:$0xff]
    %v1423 = vld [vmem:[%s4 + $0x30] sm:$0xff]
    %v1424 = vld [vmem:[%s4 + $0x38] sm:$0xff]
    %v1425 = vld [vmem:[%s4 + $0x40] sm:$0xff]
    %v1426 = vld [vmem:[%s4 + $0x48] sm:$0xff]
    %v1427 = vld [vmem:[%s4 + $0x50] sm:$0xff]
    %v1428 = vld [vmem:[%s4 + $0x58] sm:$0xff]
    %v1429 = vld [vmem:[%s4 + $0x60] sm:$0xff]
    %v1430 = vld [vmem:[%s4 + $0x68] sm:$0xff]
    %v1431 = vld [vmem:[%s4 + $0x70] sm:$0xff]
    %v1432 = vld [vmem:[%s4 + $0x78] sm:$0xff]
    %v1433 = vld [vmem:[%s4 + $0x80] sm:$0xff]
    %v1434 = vld [vmem:[%s4 + $0x88] sm:$0xff]
    %v1435 = vld [vmem:[%s4 + $0x90] sm:$0xff]
    %v1436 = vld [vmem:[%s4 + $0x98] sm:$0xff]
    %v1437 = vld [vmem:[%s4 + $0xa0] sm:$0xff]
    %v1438 = vld [vmem:[%s4 + $0xa8] sm:$0xff]
    %v1439 = vld [vmem:[%s4 + $0xb0] sm:$0xff]
    %v1440 = vld [vmem:[%s4 + $0xb8] sm:$0xff]
    %v1441 = vld [vmem:[%s4 + $0xc0] sm:$0xff]
    %v1442 = vld [vmem:[%s4 + $0xc8] sm:$0xff]
    %v1443 = vld [vmem:[%s4 + $0xd0] sm:$0xff]
    %v1444 = vld [vmem:[%s4 + $0xd8] sm:$0xff]
    %v1445 = vld [vmem:[%s4 + $0xe0] sm:$0xff]
    %v1446 = vld [vmem:[%s4 + $0xe8] sm:$0xff]
    %v1447 = vld [vmem:[%s4 + $0xf0] sm:$0xff]
    %v1448 = vld [vmem:[%s4 + $0xf8] sm:$0xff]
    %1449 = vmatprep.subr.mxu0 0.0
    %1450 = vmatpush1.msra.mxu0 %v1417
    %1451 = vmatprep.subr.mxu0 0.0
    %1452 = vmatpush1.msra.mxu0 %v1418
    %1453 = vmatprep.subr.mxu0 0.0
    %1454 = vmatpush1.msra.mxu0 %v1419
    %1455 = vmatprep.subr.mxu0 0.0
    %1456 = vmatpush1.msra.mxu0 %v1420
    %1457 = vmatprep.subr.mxu0 0.0
    %1458 = vmatpush1.msra.mxu0 %v1421
    %1459 = vmatprep.subr.mxu0 0.0
    %1460 = vmatpush1.msra.mxu0 %v1422
    %1461 = vmatprep.subr.mxu0 0.0
    %1462 = vmatpush1.msra.mxu0 %v1423
    %1463 = vmatprep.subr.mxu0 0.0
    %1464 = vmatpush1.msra.mxu0 %v1424
    %1465 = vmatprep.subr.mxu0 0.0
    %1466 = vmatpush1.msra.mxu0 %v1425
    %1467 = vmatprep.subr.mxu0 0.0
    %1468 = vmatpush1.msra.mxu0 %v1426
    %1469 = vmatprep.subr.mxu0 0.0
    %1470 = vmatpush1.msra.mxu0 %v1427
    %1471 = vmatprep.subr.mxu0 0.0
    %1472 = vmatpush1.msra.mxu0 %v1428
    %1473 = vmatprep.subr.mxu0 0.0
    %1474 = vmatpush1.msra.mxu0 %v1429
    %1475 = vmatprep.subr.mxu0 0.0
    %1476 = vmatpush1.msra.mxu0 %v1430
    %1477 = vmatprep.subr.mxu0 0.0
    %1478 = vmatpush1.msra.mxu0 %v1431
    %1479 = vmatprep.subr.mxu0 0.0
    %1480 = vmatpush1.msra.mxu0 %v1432
    %1481 = vmatprep.subr.mxu0 0.0
    %1482 = vmatpush1.msra.mxu0 %v1433
    %1483 = vmatprep.subr.mxu0 0.0
    %1484 = vmatpush1.msra.mxu0 %v1434
    %1485 = vmatprep.subr.mxu0 0.0
    %1486 = vmatpush1.msra.mxu0 %v1435
    %1487 = vmatprep.subr.mxu0 0.0
    %1488 = vmatpush1.msra.mxu0 %v1436
    %1489 = vmatprep.subr.mxu0 0.0
    %1490 = vmatpush1.msra.mxu0 %v1437
    %1491 = vmatprep.subr.mxu0 0.0
    %1492 = vmatpush1.msra.mxu0 %v1438
    %1493 = vmatprep.subr.mxu0 0.0
    %1494 = vmatpush1.msra.mxu0 %v1439
    %1495 = vmatprep.subr.mxu0 0.0
    %1496 = vmatpush1.msra.mxu0 %v1440
    %1497 = vmatprep.subr.mxu0 0.0
    %1498 = vmatpush1.msra.mxu0 %v1441
    %1499 = vmatprep.subr.mxu0 0.0
    %1500 = vmatpush1.msra.mxu0 %v1442
    %1501 = vmatprep.subr.mxu0 0.0
    %1502 = vmatpush1.msra.mxu0 %v1443
    %1503 = vmatprep.subr.mxu0 0.0
    %1504 = vmatpush1.msra.mxu0 %v1444
    %1505 = vmatprep.subr.mxu0 0.0
    %1506 = vmatpush1.msra.mxu0 %v1445
    %1507 = vmatprep.subr.mxu0 0.0
    %1508 = vmatpush1.msra.mxu0 %v1446
    %1509 = vmatprep.subr.mxu0 0.0
    %1510 = vmatpush1.msra.mxu0 %v1447
    %1511 = vmatprep.subr.mxu0 0.0
    %1512 = vmatpush1.msra.mxu0 %v1448
    %1513 = vmatprep.mubr.f32.mxu0 %v1416
    %1514 = vmatmul.mubr.f32.gmra.mrb[0].mxu0 %v1409
    %v1515 = vpop.f32.mrb[0].mxu0
    %v1516 = vadd.f32 0.0, %v1515
    %v1517 = vpop.f32.mrb[0].mxu0
    %1518 = vdwg.mxu0
    %1519 = vst [vmem:[#allocation2] sm:$0x3] %v1516
    // Predicated region
    $region22: #{encoder_forward.1} parent=1 // pred_check
      _
    $region23: #{encoder_forward.1} parent=1 // pred_check_branch
      %1521 = sbr.rel (0) target = $region25
    $region24: #{encoder_forward.1} parent=1 // pred_region
      %s1523 = ssub.s32 32, 32
      %1524 = vsyncadd [#allocation3], %s1523
      %s1526 = sshll.u32 [#allocation2], 4
      %s1527 = int_to_ptr.vmem [resolvable:$true] %s1526
      %1529 = dma.vmem_to_hbm [thread:$0]  %s1527, 32, %s5, [#allocation3]
    $region25: #{encoder_forward.1} parent=1 // pred_fallthru
      _
    // Predicated region
    $region26: #{encoder_forward.1} parent=1 // pred_check
      _
    $region27: #{encoder_forward.1} parent=1 // pred_check_branch
      %1531 = sbr.rel (0) target = $region29
    $region28: #{encoder_forward.1} parent=1 // pred_region
      %1532 = dma.done [#allocation3], 32
    $region29: #{encoder_forward.1} parent=1 // pred_fallthru
      _
    %1533 = vsyncpa [#allocation3], 1

</llo_original>
